<compile_context>
chip_gen: v6e
topology: v6e:2x2x1
jax: 0.10.0
libtpu: 0.0.40
codegen_flags: <defaults>
</compile_context>

<pallas_src>
import functools
import math

import jax
import jax.numpy as jnp
from jax.experimental import pallas as pl
from jax.experimental.pallas import tpu as pltpu

LN_EPS = 1e-5

_ROW_TILE_MAX = 256    # row tile for (B*T, D) slabs
_COL_TILE_MAX = 512    # output-column tile (multiple of 128)


# ------------------------------ small helpers -------------------------------


def _round_up(n, m):
    return (n + m - 1) // m * m


def _pick_col_tile(dout, max_tile=_COL_TILE_MAX):
    """Pad `dout` up to a multiple of 128 and pick the largest 128-multiple
    tile (<= max_tile) that divides the padded extent (minimal pad waste)."""
    dp = _round_up(dout, 128)
    n128 = dp // 128
    best = 128
    k = 1
    while 128 * k <= max_tile and k <= n128:
        if n128 % k == 0:
            best = 128 * k
        k += 1
    return best, dp


def _rows_outer_better(Np, Dop, rt, ct):
    """Choose grid ordering minimizing re-streamed HBM bytes.
    rows-outer: W streamed R times, x once.  cols-outer: x streamed C times,
    W once.  (Common factor D*itemsize cancels.)"""
    R, C = Np // rt, Dop // ct
    return R * Dop + Np <= C * Np + Dop


def _pad2(x, n0, n1):
    p0, p1 = n0 - x.shape[0], n1 - x.shape[1]
    if p0 == 0 and p1 == 0:
        return x
    return jnp.pad(x, ((0, p0), (0, p1)))


def _pad_seq(x, tp):
    # pad axis 1 of a (BH, T, hd) tensor
    p = tp - x.shape[1]
    if p == 0:
        return x
    return jnp.pad(x, ((0, 0), (0, p), (0, 0)))


def _ln_f32(x, g, b):
    xf = x.astype(jnp.float32)
    mean = jnp.mean(xf, axis=-1, keepdims=True)
    var = jnp.mean(jnp.square(xf - mean), axis=-1, keepdims=True)
    return (xf - mean) * jax.lax.rsqrt(var + LN_EPS) * g.astype(jnp.float32) \
        + b.astype(jnp.float32)


def _gelu_tanh(x):
    c = math.sqrt(2.0 / math.pi)
    return 0.5 * x * (1.0 + jnp.tanh(c * (x + 0.044715 * x * x * x)))


# ------------------------------ Pallas kernels -------------------------------


def ln_linear_bias_kernel(x_ref, g_ref, b_ref, w_ref, bias_ref, o_ref):
    xn = _ln_f32(x_ref[...], g_ref[...], b_ref[...])
    acc = jnp.dot(xn.astype(w_ref.dtype), w_ref[...],
                  preferred_element_type=jnp.float32)
    acc = acc + bias_ref[...].astype(jnp.float32)
    o_ref[...] = acc.astype(o_ref.dtype)


def ln_linear_nobias_kernel(x_ref, g_ref, b_ref, w_ref, o_ref):
    xn = _ln_f32(x_ref[...], g_ref[...], b_ref[...])
    acc = jnp.dot(xn.astype(w_ref.dtype), w_ref[...],
                  preferred_element_type=jnp.float32)
    o_ref[...] = acc.astype(o_ref.dtype)


def linear_residual_kernel(x_ref, w_ref, bias_ref, res_ref, o_ref):
    # o = residual + x @ W + b   (fused residual add in the epilogue)
    acc = jnp.dot(x_ref[...], w_ref[...], preferred_element_type=jnp.float32)
    acc = acc + bias_ref[...].astype(jnp.float32) + res_ref[...].astype(jnp.float32)
    o_ref[...] = acc.astype(o_ref.dtype)


def ln_mlp_residual_kernel(x_ref, g_ref, b_ref, w1_ref, b1_ref, w2_ref, b2_ref,
                           o_ref, acc_ref):
    # Fused: x + W2 @ gelu(W1 @ LN(x) + b1) + b2, tiled over the intermediate
    # dimension I (reduction axis = grid axis 1, fp32 accumulator scratch).
    i = pl.program_id(1)

    @pl.when(i == 0)
    def _():
        acc_ref[...] = jnp.zeros_like(acc_ref)

    xn = _ln_f32(x_ref[...], g_ref[...], b_ref[...])
    h = jnp.dot(xn.astype(w1_ref.dtype), w1_ref[...],
                preferred_element_type=jnp.float32)
    h = _gelu_tanh(h + b1_ref[...].astype(jnp.float32))
    acc_ref[...] += jnp.dot(h.astype(w2_ref.dtype), w2_ref[...],
                            preferred_element_type=jnp.float32)

    @pl.when(i == pl.num_programs(1) - 1)
    def _():
        out = acc_ref[...] + b2_ref[...].astype(jnp.float32) \
            + x_ref[...].astype(jnp.float32)
        o_ref[...] = out.astype(o_ref.dtype)


def flash_attn_kernel(q_ref, k_ref, v_ref, o_ref, m_ref, l_ref, acc_ref, *,
                      scale, t_tile):
    qi = pl.program_id(1)
    ki = pl.program_id(2)

    @pl.when(ki == 0)
    def _():
        m_ref[...] = jnp.full_like(m_ref, -jnp.inf)
        l_ref[...] = jnp.zeros_like(l_ref)
        acc_ref[...] = jnp.zeros_like(acc_ref)

    # Compute only at or below the causal diagonal (blocks above are skipped
    # and, thanks to the clamped KV index_map, never DMA'd either).
    @pl.when(ki <= qi)
    def _():
        q = q_ref[0]                                     # (tq, hd) bf16
        k = k_ref[0]                                     # (tk, hd) bf16
        # QK^T without an explicit transpose (contract last dims).
        s = jax.lax.dot_general(
            q, k, (((1,), (1,)), ((), ())),
            preferred_element_type=jnp.float32) * scale   # (tq, tk) f32
        # Causal mask from iota (only really bites on the diagonal block;
        # cheap VPU filler under the MXU work).
        q_pos = qi * t_tile + jax.lax.broadcasted_iota(jnp.int32, s.shape, 0)
        k_pos = ki * t_tile + jax.lax.broadcasted_iota(jnp.int32, s.shape, 1)
        s = jnp.where(k_pos <= q_pos, s, -1e30)

        m_prev = m_ref[...]
        m_new = jnp.maximum(m_prev, jnp.max(s, axis=-1, keepdims=True))
        alpha = jnp.exp(m_prev - m_new)
        p = jnp.exp(s - m_new)
        l_ref[...] = alpha * l_ref[...] + jnp.sum(p, axis=-1, keepdims=True)
        acc_ref[...] = alpha * acc_ref[...] + jnp.dot(
            p.astype(v_ref.dtype), v_ref[0],
            preferred_element_type=jnp.float32)
        m_ref[...] = m_new

    # Diagonal block is the last one with real work for this query tile.
    @pl.when(ki == qi)
    def _():
        inv_l = pl.reciprocal(l_ref[...], approx=True)
        o_ref[0] = (acc_ref[...] * inv_l).astype(o_ref.dtype)


# ------------------------------ Pallas wrappers ------------------------------


def ln_linear(x, gamma, beta, w, bias=None, *, out_dtype=None):
    """out = LN(x) @ w (+ bias).  Tiled over rows and output columns."""
    N, D = x.shape
    Dout = w.shape[1]
    out_dtype = out_dtype if out_dtype is not None else x.dtype

    rt = min(_ROW_TILE_MAX, _round_up(N, 8))
    Np = _round_up(N, rt)
    ct, Dop = _pick_col_tile(Dout)

    xp = _pad2(x, Np, D)
    wp = _pad2(w, D, Dop)
    g2 = gamma.reshape(1, D)
    b2 = beta.reshape(1, D)

    if _rows_outer_better(Np, Dop, rt, ct):
        grid = (Np // rt, Dop // ct)
        rix, cix = (lambda r, c: r), (lambda r, c: c)
    else:
        grid = (Dop // ct, Np // rt)
        rix, cix = (lambda c, r: r), (lambda c, r: c)

    x_map = lambda *g: (rix(*g), 0)
    w_map = lambda *g: (0, cix(*g))
    v_map = lambda *g: (0, 0)
    o_map = lambda *g: (rix(*g), cix(*g))

    in_specs = [
        pl.BlockSpec((rt, D), x_map),
        pl.BlockSpec((1, D), v_map),
        pl.BlockSpec((1, D), v_map),
        pl.BlockSpec((D, ct), w_map),
    ]
    args = [xp, g2, b2, wp]
    if bias is not None:
        in_specs.append(pl.BlockSpec((1, ct), w_map))
        args.append(_pad2(bias.reshape(1, Dout), 1, Dop))
        kernel = ln_linear_bias_kernel
    else:
        kernel = ln_linear_nobias_kernel   # bias-free path (lm_head)

    out = pl.pallas_call(
        kernel,
        out_shape=jax.ShapeDtypeStruct((Np, Dop), out_dtype),
        grid=grid,
        in_specs=in_specs,
        out_specs=pl.BlockSpec((rt, ct), o_map),
        compiler_params=pltpu.CompilerParams(
            dimension_semantics=("parallel", "parallel")),
    )(*args)
    return out[:N, :Dout]


def linear_residual(x, w, bias, res):
    """out = res + x @ w + bias.  Tiled over rows and output columns."""
    N, Din = x.shape
    Dout = w.shape[1]

    rt = min(_ROW_TILE_MAX, _round_up(N, 8))
    Np = _round_up(N, rt)
    ct, Dop = _pick_col_tile(Dout)

    xp = _pad2(x, Np, Din)
    wp = _pad2(w, Din, Dop)
    bp = _pad2(bias.reshape(1, Dout), 1, Dop)
    rp = _pad2(res, Np, Dop)

    if _rows_outer_better(Np, Dop, rt, ct):
        grid = (Np // rt, Dop // ct)
        rix, cix = (lambda r, c: r), (lambda r, c: c)
    else:
        grid = (Dop // ct, Np // rt)
        rix, cix = (lambda c, r: r), (lambda c, r: c)

    x_map = lambda *g: (rix(*g), 0)
    w_map = lambda *g: (0, cix(*g))
    o_map = lambda *g: (rix(*g), cix(*g))

    out = pl.pallas_call(
        linear_residual_kernel,
        out_shape=jax.ShapeDtypeStruct((Np, Dop), res.dtype),
        grid=grid,
        in_specs=[
            pl.BlockSpec((rt, Din), x_map),
            pl.BlockSpec((Din, ct), w_map),
            pl.BlockSpec((1, ct), w_map),
            pl.BlockSpec((rt, ct), o_map),
        ],
        out_specs=pl.BlockSpec((rt, ct), o_map),
        compiler_params=pltpu.CompilerParams(
            dimension_semantics=("parallel", "parallel")),
    )(xp, wp, bp, rp)
    return out[:N, :Dout]


def ln_mlp_residual(x, gamma, beta, w1, b1, w2, b2):
    """out = x + gelu(LN(x) @ w1 + b1) @ w2 + b2, tiled over rows and I.
    Reduction over I must stay innermost (scratch fp32 accumulator)."""
    N, D = x.shape
    I = w1.shape[1]

    rt = min(_ROW_TILE_MAX, _round_up(N, 8))
    Np = _round_up(N, rt)
    it, Ip = _pick_col_tile(I)

    xp = _pad2(x, Np, D)
    w1p = _pad2(w1, D, Ip)
    b1p = _pad2(b1.reshape(1, I), 1, Ip)
    w2p = _pad2(w2, Ip, D)

    out = pl.pallas_call(
        ln_mlp_residual_kernel,
        out_shape=jax.ShapeDtypeStruct((Np, D), x.dtype),
        grid=(Np // rt, Ip // it),
        in_specs=[
            pl.BlockSpec((rt, D), lambda r, i: (r, 0)),
            pl.BlockSpec((1, D), lambda r, i: (0, 0)),
            pl.BlockSpec((1, D), lambda r, i: (0, 0)),
            pl.BlockSpec((D, it), lambda r, i: (0, i)),
            pl.BlockSpec((1, it), lambda r, i: (0, i)),
            pl.BlockSpec((it, D), lambda r, i: (i, 0)),
            pl.BlockSpec((1, D), lambda r, i: (0, 0)),
        ],
        out_specs=pl.BlockSpec((rt, D), lambda r, i: (r, 0)),
        scratch_shapes=[pltpu.VMEM((rt, D), jnp.float32)],
        compiler_params=pltpu.CompilerParams(
            dimension_semantics=("parallel", "arbitrary")),
    )(xp, gamma.reshape(1, D), beta.reshape(1, D), w1p, b1p, w2p,
      b2.reshape(1, D))
    return out[:N]


def flash_attention(q, k, v, scale):
    """q/k/v: (B*H, T, hd).  Flash-style online softmax, causal."""
    BH, T, hd = q.shape
    tt = min(128, _round_up(T, 8))
    Tp = _round_up(T, tt)
    qp, kp, vp = _pad_seq(q, Tp), _pad_seq(k, Tp), _pad_seq(v, Tp)

    kern = functools.partial(flash_attn_kernel, scale=scale, t_tile=tt)
    q_spec = pl.BlockSpec((1, tt, hd), lambda b, qi, ki: (b, qi, 0))
    # Clamp the KV block index at the causal diagonal: blocks strictly above
    # the diagonal are never computed (pl.when skip), and clamping makes their
    # block index equal to the already-resident diagonal block, so no K/V DMA
    # is issued for them (~2x less attention HBM traffic).
    kv_spec = pl.BlockSpec((1, tt, hd),
                           lambda b, qi, ki: (b, jnp.minimum(qi, ki), 0))

    out = pl.pallas_call(
        kern,
        out_shape=jax.ShapeDtypeStruct((BH, Tp, hd), q.dtype),
        grid=(BH, Tp // tt, Tp // tt),
        in_specs=[q_spec, kv_spec, kv_spec],
        out_specs=pl.BlockSpec((1, tt, hd), lambda b, qi, ki: (b, qi, 0)),
        scratch_shapes=[pltpu.VMEM((tt, 1), jnp.float32),
                        pltpu.VMEM((tt, 1), jnp.float32),
                        pltpu.VMEM((tt, hd), jnp.float32)],
        compiler_params=pltpu.CompilerParams(
            dimension_semantics=("parallel", "parallel", "arbitrary")),
    )(qp, kp, vp)
    return out[:, :T, :]


# ------------------------------ model definition -----------------------------


def init_params(key, cfg, dtype=jnp.bfloat16):
    D, I, V, BS, L = (cfg["dim"], cfg["inter"], cfg["vocab"],
                      cfg["block_size"], cfg["n_layer"])
    std = 0.02
    keys = jax.random.split(key, 3 + 4 * L)

    def w_init(k, shape):
        return (std * jax.random.normal(k, shape, jnp.float32)).astype(dtype)

    params = {
        "wte": w_init(keys[0], (V, D)),
        "wpe": w_init(keys[1], (BS, D)),
        "lnf_g": jnp.ones((D,), jnp.float32),
        "lnf_b": jnp.zeros((D,), jnp.float32),
        # lm_head weight stored as (D, V) == W^T of nn.Linear(D, V, bias=False)
        "lm_head_w": w_init(keys[2], (D, V)),
        "h": [],
    }
    for li in range(L):
        k0, k1, k2, k3 = keys[3 + 4 * li: 3 + 4 * li + 4]
        params["h"].append({
            "ln1_g": jnp.ones((D,), jnp.float32),
            "ln1_b": jnp.zeros((D,), jnp.float32),
            "attn_w": w_init(k0, (D, 3 * D)),
            "attn_b": jnp.zeros((3 * D,), jnp.float32),
            "proj_w": w_init(k1, (D, D)),
            "proj_b": jnp.zeros((D,), jnp.float32),
            "ln2_g": jnp.ones((D,), jnp.float32),
            "ln2_b": jnp.zeros((D,), jnp.float32),
            "fc_w": w_init(k2, (D, I)),
            "fc_b": jnp.zeros((I,), jnp.float32),
            "mlp_proj_w": w_init(k3, (I, D)),
            "mlp_proj_b": jnp.zeros((D,), jnp.float32),
        })
    return params


def gpt_forward(params, idx, cfg):
    """idx: (B, T) int32 tokens; input_pos=None path (arange positions)."""
    B, T = idx.shape
    D, H, V = cfg["dim"], cfg["n_head"], cfg["vocab"]
    hd = D // H
    scale = 1.0 / math.sqrt(hd)
    act_dtype = params["wte"].dtype

    pos = jnp.arange(T)
    x = (params["wte"][idx] + params["wpe"][pos][None, :, :]).astype(act_dtype)
    x = x.reshape(B * T, D)                              # (B*T, D)

    for layer in params["h"]:
        # --- attention block: LN1 fused into QKV projection ---
        qkv = ln_linear(x, layer["ln1_g"], layer["ln1_b"],
                        layer["attn_w"], layer["attn_b"])        # (B*T, 3D)
        qkv = qkv.reshape(B, T, 3, H, hd)
        qkv = jnp.transpose(qkv, (2, 0, 3, 1, 4))                # (3, B, H, T, hd)
        q = qkv[0].reshape(B * H, T, hd)
        k = qkv[1].reshape(B * H, T, hd)
        v = qkv[2].reshape(B * H, T, hd)

        y = flash_attention(q, k, v, scale)                      # (B*H, T, hd)
        y = jnp.transpose(y.reshape(B, H, T, hd), (0, 2, 1, 3)).reshape(B * T, D)

        # out projection with fused residual add
        x = linear_residual(y, layer["proj_w"], layer["proj_b"], x)

        # --- MLP block: LN2 + fc + gelu + proj + residual, all fused ---
        x = ln_mlp_residual(x, layer["ln2_g"], layer["ln2_b"],
                            layer["fc_w"], layer["fc_b"],
                            layer["mlp_proj_w"], layer["mlp_proj_b"])

    # final LN fused into the (vocab-tiled, bias-free) lm_head matmul
    logits = ln_linear(x, params["lnf_g"], params["lnf_b"],
                       params["lm_head_w"], bias=None, out_dtype=jnp.float32)
    return logits.reshape(B, T, V)


# ----------------------------------- main ------------------------------------

if __name__ == "__main__":
    # small synthetic config consistent with GPTConfig structure
    cfg = dict(
        vocab=96,          # vocab_size (non-multiple of 128 -> exercises padding)
        block_size=32,     # max positions
        dim=64,
        n_head=4,          # head_dim = 16
        n_layer=2,
        inter=256,         # intermediate_size = 4 * dim
    )

    key = jax.random.PRNGKey(0)
    pkey, ikey = jax.random.split(key)
    params = init_params(pkey, cfg)

    B, T = 2, 8
    idx = jax.random.randint(ikey, (B, T), 0, cfg["vocab"], dtype=jnp.int32)

    logits = jax.jit(lambda p, i: gpt_forward(p, i, cfg))(params, idx)
    logits = jax.block_until_ready(logits)

    assert logits.shape == (B, T, cfg["vocab"])
    assert bool(jnp.all(jnp.isfinite(logits)))
    # TODO(synk): KV-cache decode path (input_pos) and the multinomial sampling
    # path are not ported; only the deterministic prefill forward is in Pallas.
    print("KERNEL_OK")
</pallas_src>

<mosaic_0001>
module attributes {stable_mosaic.version = 11 : i64} {
  func.func @ln_linear_bias_kernel(%arg0: i32, %arg1: i32, %arg2: memref<16x64xbf16, #tpu.memory_space<vmem>>, %arg3: memref<1x64xf32, #tpu.memory_space<vmem>>, %arg4: memref<1x64xf32, #tpu.memory_space<vmem>>, %arg5: memref<64x256xbf16, #tpu.memory_space<vmem>>, %arg6: memref<1x256xf32, #tpu.memory_space<vmem>>, %arg7: memref<16x256xbf16, #tpu.memory_space<vmem>>) attributes {dimension_semantics = [#tpu.dimension_semantics<parallel>, #tpu.dimension_semantics<parallel>], iteration_bounds = array<i64: 1, 1>, scalar_prefetch = 0 : i64, scratch_operands = 0 : i64, tpu.core_type = #tpu.core_type<tc>, window_params = [{transform_indices = @transform_0, window_bounds = array<i64: 16, 64>}, {pipeline_mode = #tpu.pipeline_mode<synchronous>, transform_indices = @transform_1, window_bounds = array<i64: 1, 64>}, {pipeline_mode = #tpu.pipeline_mode<synchronous>, transform_indices = @transform_2, window_bounds = array<i64: 1, 64>}, {transform_indices = @transform_3, window_bounds = array<i64: 64, 256>}, {transform_indices = @transform_4, window_bounds = array<i64: 1, 256>}, {transform_indices = @transform_5, window_bounds = array<i64: 16, 256>}]} {
    %c0 = arith.constant 0 : index
    %c0_0 = arith.constant 0 : index
    %0 = vector.load %arg2[%c0, %c0_0] : memref<16x64xbf16, #tpu.memory_space<vmem>>, vector<16x64xbf16>
    %c0_1 = arith.constant 0 : index
    %c0_2 = arith.constant 0 : index
    %1 = vector.load %arg3[%c0_1, %c0_2] : memref<1x64xf32, #tpu.memory_space<vmem>>, vector<1x64xf32>
    %c0_3 = arith.constant 0 : index
    %c0_4 = arith.constant 0 : index
    %2 = vector.load %arg4[%c0_3, %c0_4] : memref<1x64xf32, #tpu.memory_space<vmem>>, vector<1x64xf32>
    %3 = arith.extf %0 : vector<16x64xbf16> to vector<16x64xf32>
    %cst = arith.constant dense<0.000000e+00> : vector<16xf32>
    %4 = vector.multi_reduction <add>, %3, %cst [1] : vector<16x64xf32> to vector<16xf32>
    %5 = vector.shape_cast %4 : vector<16xf32> to vector<16x1xf32>
    %cst_5 = arith.constant 6.400000e+01 : f32
    %6 = vector.broadcast %cst_5 : f32 to vector<16x1xf32>
    %7 = arith.divf %5, %6 : vector<16x1xf32>
    %8 = vector.broadcast %7 : vector<16x1xf32> to vector<16x64xf32>
    %9 = arith.subf %3, %8 : vector<16x64xf32>
    %10 = arith.mulf %9, %9 : vector<16x64xf32>
    %cst_6 = arith.constant dense<0.000000e+00> : vector<16xf32>
    %11 = vector.multi_reduction <add>, %10, %cst_6 [1] : vector<16x64xf32> to vector<16xf32>
    %12 = vector.shape_cast %11 : vector<16xf32> to vector<16x1xf32>
    %cst_7 = arith.constant 6.400000e+01 : f32
    %13 = vector.broadcast %cst_7 : f32 to vector<16x1xf32>
    %14 = arith.divf %12, %13 : vector<16x1xf32>
    %15 = vector.broadcast %7 : vector<16x1xf32> to vector<16x64xf32>
    %16 = arith.subf %3, %15 : vector<16x64xf32>
    %cst_8 = arith.constant 9.99999974E-6 : f32
    %17 = vector.broadcast %cst_8 : f32 to vector<16x1xf32>
    %18 = arith.addf %14, %17 : vector<16x1xf32>
    %19 = math.rsqrt %18 : vector<16x1xf32>
    %20 = vector.broadcast %19 : vector<16x1xf32> to vector<16x64xf32>
    %21 = arith.mulf %16, %20 : vector<16x64xf32>
    %22 = vector.broadcast %1 : vector<1x64xf32> to vector<16x64xf32>
    %23 = arith.mulf %21, %22 : vector<16x64xf32>
    %24 = vector.broadcast %2 : vector<1x64xf32> to vector<16x64xf32>
    %25 = arith.addf %23, %24 : vector<16x64xf32>
    %26 = arith.truncf %25 : vector<16x64xf32> to vector<16x64xbf16>
    %c0_9 = arith.constant 0 : index
    %c0_10 = arith.constant 0 : index
    %27 = vector.load %arg5[%c0_9, %c0_10] : memref<64x256xbf16, #tpu.memory_space<vmem>>, vector<64x256xbf16>
    %cst_11 = arith.constant dense<0.000000e+00> : vector<16x256xf32>
    %28 = tpu.matmul %26, %27, %cst_11 {dimension_numbers = #tpu.dot_dimension_numbers<[1], [0], [0], [1], [0, 0, 1, 1], [], []>} : vector<16x64xbf16>, vector<64x256xbf16>, vector<16x256xf32> -> vector<16x256xf32>
    %c0_12 = arith.constant 0 : index
    %c0_13 = arith.constant 0 : index
    %29 = vector.load %arg6[%c0_12, %c0_13] : memref<1x256xf32, #tpu.memory_space<vmem>>, vector<1x256xf32>
    %30 = vector.broadcast %29 : vector<1x256xf32> to vector<16x256xf32>
    %31 = arith.addf %28, %30 : vector<16x256xf32>
    %32 = arith.truncf %31 : vector<16x256xf32> to vector<16x256xbf16>
    %c0_14 = arith.constant 0 : index
    %c0_15 = arith.constant 0 : index
    %33 = vector.load %arg7[%c0_14, %c0_15] : memref<16x256xbf16, #tpu.memory_space<vmem>>, vector<16x256xbf16>
    tpu.vector_store %arg7[%c0_14, %c0_15], %32 {strides = array<i32>} : memref<16x256xbf16, #tpu.memory_space<vmem>>, vector<16x256xbf16>,
    return
  }
  func.func @transform_0(%arg0: i32, %arg1: i32) -> (i32, i32) {
    %c0_i32 = arith.constant 0 : i32
    %c0_i32_0 = arith.constant 0 : i32
    return %arg0, %c0_i32 : i32, i32
  }
  func.func @transform_1(%arg0: i32, %arg1: i32) -> (i32, i32) {
    %c0_i32 = arith.constant 0 : i32
    %c0_i32_0 = arith.constant 0 : i32
    %c0_i32_1 = arith.constant 0 : i32
    return %c0_i32, %c0_i32_0 : i32, i32
  }
  func.func @transform_2(%arg0: i32, %arg1: i32) -> (i32, i32) {
    %c0_i32 = arith.constant 0 : i32
    %c0_i32_0 = arith.constant 0 : i32
    %c0_i32_1 = arith.constant 0 : i32
    return %c0_i32, %c0_i32_0 : i32, i32
  }
  func.func @transform_3(%arg0: i32, %arg1: i32) -> (i32, i32) {
    %c0_i32 = arith.constant 0 : i32
    %c0_i32_0 = arith.constant 0 : i32
    return %c0_i32, %arg1 : i32, i32
  }
  func.func @transform_4(%arg0: i32, %arg1: i32) -> (i32, i32) {
    %c0_i32 = arith.constant 0 : i32
    %c0_i32_0 = arith.constant 0 : i32
    return %c0_i32, %arg1 : i32, i32
  }
  func.func @transform_5(%arg0: i32, %arg1: i32) -> (i32, i32) {
    %c0_i32 = arith.constant 0 : i32
    return %arg0, %arg1 : i32, i32
  }
}

module attributes {stable_mosaic.version = 11 : i64} {
  func.func @flash_attn_kernel(%arg0: i32, %arg1: i32, %arg2: i32, %arg3: memref<1x8x16xbf16, #tpu.memory_space<vmem>>, %arg4: memref<1x8x16xbf16, #tpu.memory_space<vmem>>, %arg5: memref<1x8x16xbf16, #tpu.memory_space<vmem>>, %arg6: memref<1x8x16xbf16, #tpu.memory_space<vmem>>, %arg7: memref<8x1xf32, #tpu.memory_space<vmem>>, %arg8: memref<8x1xf32, #tpu.memory_space<vmem>>, %arg9: memref<8x16xf32, #tpu.memory_space<vmem>>) attributes {dimension_semantics = [#tpu.dimension_semantics<parallel>, #tpu.dimension_semantics<parallel>, #tpu.dimension_semantics<arbitrary>], iteration_bounds = array<i64: 8, 1, 1>, scalar_prefetch = 0 : i64, scratch_operands = 3 : i64, tpu.core_type = #tpu.core_type<tc>, window_params = [{transform_indices = @transform_0, window_bounds = array<i64: 1, 8, 16>}, {transform_indices = @transform_1, window_bounds = array<i64: 1, 8, 16>}, {transform_indices = @transform_2, window_bounds = array<i64: 1, 8, 16>}, {transform_indices = @transform_3, window_bounds = array<i64: 1, 8, 16>}]} {
    %c0_i32 = arith.constant 0 : i32
    %0 = arith.cmpi eq, %arg2, %c0_i32 : i32
    %1 = arith.extui %0 : i1 to i32
    %c0_i32_0 = arith.constant 0 : i32
    %2 = arith.cmpi ne, %1, %c0_i32_0 : i32
    scf.if %2 {
      %cst = arith.constant 0xFF800000 : f32
      %9 = vector.broadcast %cst : f32 to vector<8x1xf32>
      %c0 = arith.constant 0 : index
      %c0_3 = arith.constant 0 : index
      %10 = vector.load %arg7[%c0, %c0_3] : memref<8x1xf32, #tpu.memory_space<vmem>>, vector<8x1xf32>
      tpu.vector_store %arg7[%c0, %c0_3], %9 {strides = array<i32>} : memref<8x1xf32, #tpu.memory_space<vmem>>, vector<8x1xf32>,
      %cst_4 = arith.constant 0.000000e+00 : f32
      %11 = vector.broadcast %cst_4 : f32 to vector<8x1xf32>
      %c0_5 = arith.constant 0 : index
      %c0_6 = arith.constant 0 : index
      %12 = vector.load %arg8[%c0_5, %c0_6] : memref<8x1xf32, #tpu.memory_space<vmem>>, vector<8x1xf32>
      tpu.vector_store %arg8[%c0_5, %c0_6], %11 {strides = array<i32>} : memref<8x1xf32, #tpu.memory_space<vmem>>, vector<8x1xf32>,
      %cst_7 = arith.constant 0.000000e+00 : f32
      %13 = vector.broadcast %cst_7 : f32 to vector<8x16xf32>
      %c0_8 = arith.constant 0 : index
      %c0_9 = arith.constant 0 : index
      %14 = vector.load %arg9[%c0_8, %c0_9] : memref<8x16xf32, #tpu.memory_space<vmem>>, vector<8x16xf32>
      tpu.vector_store %arg9[%c0_8, %c0_9], %13 {strides = array<i32>} : memref<8x16xf32, #tpu.memory_space<vmem>>, vector<8x16xf32>,
    } else {
    }
    %3 = arith.cmpi sle, %arg2, %arg1 : i32
    %4 = arith.extui %3 : i1 to i32
    %c0_i32_1 = arith.constant 0 : i32
    %5 = arith.cmpi ne, %4, %c0_i32_1 : i32
    scf.if %5 {
      %c0 = arith.constant 0 : index
      %c0_3 = arith.constant 0 : index
      %c0_4 = arith.constant 0 : index
      %9 = vector.load %arg3[%c0, %c0_3, %c0_4] : memref<1x8x16xbf16, #tpu.memory_space<vmem>>, vector<1x8x16xbf16>
      %10 = vector.shape_cast %9 : vector<1x8x16xbf16> to vector<8x16xbf16>
      %c0_5 = arith.constant 0 : index
      %c0_6 = arith.constant 0 : index
      %c0_7 = arith.constant 0 : index
      %11 = vector.load %arg4[%c0_5, %c0_6, %c0_7] : memref<1x8x16xbf16, #tpu.memory_space<vmem>>, vector<1x8x16xbf16>
      %12 = vector.shape_cast %11 : vector<1x8x16xbf16> to vector<8x16xbf16>
      %cst = arith.constant dense<0.000000e+00> : vector<8x8xf32>
      %13 = tpu.matmul %10, %12, %cst {dimension_numbers = #tpu.dot_dimension_numbers<[1], [1], [0], [0], [0, 0, 1, 0], [], []>} : vector<8x16xbf16>, vector<8x16xbf16>, vector<8x8xf32> -> vector<8x8xf32>
      %cst_8 = arith.constant 2.500000e-01 : f32
      %14 = vector.broadcast %cst_8 : f32 to vector<8x8xf32>
      %15 = arith.mulf %13, %14 : vector<8x8xf32>
      %c8_i32 = arith.constant 8 : i32
      %16 = arith.muli %arg1, %c8_i32 : i32
      %17 = tpu.iota {dimensions = array<i32: 0>} : vector<8x8xi32>
      %18 = vector.broadcast %16 : i32 to vector<8x8xi32>
      %19 = arith.addi %18, %17 : vector<8x8xi32>
      %c8_i32_9 = arith.constant 8 : i32
      %20 = arith.muli %arg2, %c8_i32_9 : i32
      %21 = tpu.iota {dimensions = array<i32: 1>} : vector<8x8xi32>
      %22 = vector.broadcast %20 : i32 to vector<8x8xi32>
      %23 = arith.addi %22, %21 : vector<8x8xi32>
      %24 = arith.cmpi sle, %23, %19 : vector<8x8xi32>
      %cst_10 = arith.constant -1.000000e+30 : f32
      %25 = vector.broadcast %cst_10 : f32 to vector<8x8xf32>
      %26 = arith.select %24, %15, %25 : vector<8x8xi1>, vector<8x8xf32>
      %c0_11 = arith.constant 0 : index
      %c0_12 = arith.constant 0 : index
      %27 = vector.load %arg7[%c0_11, %c0_12] : memref<8x1xf32, #tpu.memory_space<vmem>>, vector<8x1xf32>
      %cst_13 = arith.constant dense<0xFF800000> : vector<8xf32>
      %28 = vector.multi_reduction <maximumf>, %26, %cst_13 [1] : vector<8x8xf32> to vector<8xf32>
      %29 = vector.shape_cast %28 : vector<8xf32> to vector<8x1xf32>
      %30 = arith.maximumf %27, %29 : vector<8x1xf32>
      %31 = arith.subf %27, %30 : vector<8x1xf32>
      %32 = math.exp %31 : vector<8x1xf32>
      %33 = vector.broadcast %30 : vector<8x1xf32> to vector<8x8xf32>
      %34 = arith.subf %26, %33 : vector<8x8xf32>
      %35 = math.exp %34 : vector<8x8xf32>
      %c0_14 = arith.constant 0 : index
      %c0_15 = arith.constant 0 : index
      %36 = vector.load %arg8[%c0_14, %c0_15] : memref<8x1xf32, #tpu.memory_space<vmem>>, vector<8x1xf32>
      %37 = arith.mulf %32, %36 : vector<8x1xf32>
      %cst_16 = arith.constant dense<0.000000e+00> : vector<8xf32>
      %38 = vector.multi_reduction <add>, %35, %cst_16 [1] : vector<8x8xf32> to vector<8xf32>
      %39 = vector.shape_cast %38 : vector<8xf32> to vector<8x1xf32>
      %40 = arith.addf %37, %39 : vector<8x1xf32>
      %c0_17 = arith.constant 0 : index
      %c0_18 = arith.constant 0 : index
      %41 = vector.load %arg8[%c0_17, %c0_18] : memref<8x1xf32, #tpu.memory_space<vmem>>, vector<8x1xf32>
      tpu.vector_store %arg8[%c0_17, %c0_18], %40 {strides = array<i32>} : memref<8x1xf32, #tpu.memory_space<vmem>>, vector<8x1xf32>,
      %c0_19 = arith.constant 0 : index
      %c0_20 = arith.constant 0 : index
      %42 = vector.load %arg9[%c0_19, %c0_20] : memref<8x16xf32, #tpu.memory_space<vmem>>, vector<8x16xf32>
      %43 = vector.broadcast %32 : vector<8x1xf32> to vector<8x16xf32>
      %44 = arith.mulf %43, %42 : vector<8x16xf32>
      %45 = arith.truncf %35 : vector<8x8xf32> to vector<8x8xbf16>
      %c0_21 = arith.constant 0 : index
      %c0_22 = arith.constant 0 : index
      %c0_23 = arith.constant 0 : index
      %46 = vector.load %arg5[%c0_21, %c0_22, %c0_23] : memref<1x8x16xbf16, #tpu.memory_space<vmem>>, vector<1x8x16xbf16>
      %47 = vector.shape_cast %46 : vector<1x8x16xbf16> to vector<8x16xbf16>
      %cst_24 = arith.constant dense<0.000000e+00> : vector<8x16xf32>
      %48 = tpu.matmul %45, %47, %cst_24 {dimension_numbers = #tpu.dot_dimension_numbers<[1], [0], [0], [1], [0, 0, 1, 1], [], []>} : vector<8x8xbf16>, vector<8x16xbf16>, vector<8x16xf32> -> vector<8x16xf32>
      %49 = arith.addf %44, %48 : vector<8x16xf32>
      %c0_25 = arith.constant 0 : index
      %c0_26 = arith.constant 0 : index
      %50 = vector.load %arg9[%c0_25, %c0_26] : memref<8x16xf32, #tpu.memory_space<vmem>>, vector<8x16xf32>
      tpu.vector_store %arg9[%c0_25, %c0_26], %49 {strides = array<i32>} : memref<8x16xf32, #tpu.memory_space<vmem>>, vector<8x16xf32>,
      %c0_27 = arith.constant 0 : index
      %c0_28 = arith.constant 0 : index
      %51 = vector.load %arg7[%c0_27, %c0_28] : memref<8x1xf32, #tpu.memory_space<vmem>>, vector<8x1xf32>
      tpu.vector_store %arg7[%c0_27, %c0_28], %30 {strides = array<i32>} : memref<8x1xf32, #tpu.memory_space<vmem>>, vector<8x1xf32>,
    } else {
    }
    %6 = arith.cmpi eq, %arg2, %arg1 : i32
    %7 = arith.extui %6 : i1 to i32
    %c0_i32_2 = arith.constant 0 : i32
    %8 = arith.cmpi ne, %7, %c0_i32_2 : i32
    scf.if %8 {
      %c0 = arith.constant 0 : index
      %c0_3 = arith.constant 0 : index
      %9 = vector.load %arg8[%c0, %c0_3] : memref<8x1xf32, #tpu.memory_space<vmem>>, vector<8x1xf32>
      %10 = tpu.reciprocal %9 {approx = true} : vector<8x1xf32> -> vector<8x1xf32>
      %c0_4 = arith.constant 0 : index
      %c0_5 = arith.constant 0 : index
      %11 = vector.load %arg9[%c0_4, %c0_5] : memref<8x16xf32, #tpu.memory_space<vmem>>, vector<8x16xf32>
      %12 = vector.broadcast %10 : vector<8x1xf32> to vector<8x16xf32>
      %13 = arith.mulf %11, %12 : vector<8x16xf32>
      %14 = arith.truncf %13 : vector<8x16xf32> to vector<8x16xbf16>
      %c0_6 = arith.constant 0 : index
      %c0_7 = arith.constant 0 : index
      %c0_8 = arith.constant 0 : index
      %15 = vector.load %arg6[%c0_6, %c0_7, %c0_8] : memref<1x8x16xbf16, #tpu.memory_space<vmem>>, vector<1x8x16xbf16>
      %16 = vector.shape_cast %15 : vector<1x8x16xbf16> to vector<8x16xbf16>
      %17 = vector.shape_cast %14 : vector<8x16xbf16> to vector<1x8x16xbf16>
      tpu.vector_store %arg6[%c0_6, %c0_7, %c0_8], %17 {strides = array<i32>} : memref<1x8x16xbf16, #tpu.memory_space<vmem>>, vector<1x8x16xbf16>,
    } else {
    }
    return
  }
  func.func @transform_0(%arg0: i32, %arg1: i32, %arg2: i32) -> (i32, i32, i32) {
    %c0_i32 = arith.constant 0 : i32
    %c0_i32_0 = arith.constant 0 : i32
    return %arg0, %arg1, %c0_i32 : i32, i32, i32
  }
  func.func @transform_1(%arg0: i32, %arg1: i32, %arg2: i32) -> (i32, i32, i32) {
    %0 = arith.minsi %arg1, %arg2 : i32
    %c0_i32 = arith.constant 0 : i32
    %c0_i32_0 = arith.constant 0 : i32
    return %arg0, %0, %c0_i32 : i32, i32, i32
  }
  func.func @transform_2(%arg0: i32, %arg1: i32, %arg2: i32) -> (i32, i32, i32) {
    %0 = arith.minsi %arg1, %arg2 : i32
    %c0_i32 = arith.constant 0 : i32
    %c0_i32_0 = arith.constant 0 : i32
    return %arg0, %0, %c0_i32 : i32, i32, i32
  }
  func.func @transform_3(%arg0: i32, %arg1: i32, %arg2: i32) -> (i32, i32, i32) {
    %c0_i32 = arith.constant 0 : i32
    %c0_i32_0 = arith.constant 0 : i32
    return %arg0, %arg1, %c0_i32 : i32, i32, i32
  }
}

module attributes {stable_mosaic.version = 11 : i64} {
  func.func @linear_residual_kernel(%arg0: i32, %arg1: i32, %arg2: memref<16x64xbf16, #tpu.memory_space<vmem>>, %arg3: memref<64x128xbf16, #tpu.memory_space<vmem>>, %arg4: memref<1x128xf32, #tpu.memory_space<vmem>>, %arg5: memref<16x128xbf16, #tpu.memory_space<vmem>>, %arg6: memref<16x128xbf16, #tpu.memory_space<vmem>>) attributes {dimension_semantics = [#tpu.dimension_semantics<parallel>, #tpu.dimension_semantics<parallel>], iteration_bounds = array<i64: 1, 1>, scalar_prefetch = 0 : i64, scratch_operands = 0 : i64, tpu.core_type = #tpu.core_type<tc>, window_params = [{transform_indices = @transform_0, window_bounds = array<i64: 16, 64>}, {transform_indices = @transform_1, window_bounds = array<i64: 64, 128>}, {transform_indices = @transform_2, window_bounds = array<i64: 1, 128>}, {transform_indices = @transform_3, window_bounds = array<i64: 16, 128>}, {transform_indices = @transform_4, window_bounds = array<i64: 16, 128>}]} {
    %c0 = arith.constant 0 : index
    %c0_0 = arith.constant 0 : index
    %0 = vector.load %arg2[%c0, %c0_0] : memref<16x64xbf16, #tpu.memory_space<vmem>>, vector<16x64xbf16>
    %c0_1 = arith.constant 0 : index
    %c0_2 = arith.constant 0 : index
    %1 = vector.load %arg3[%c0_1, %c0_2] : memref<64x128xbf16, #tpu.memory_space<vmem>>, vector<64x128xbf16>
    %cst = arith.constant dense<0.000000e+00> : vector<16x128xf32>
    %2 = tpu.matmul %0, %1, %cst {dimension_numbers = #tpu.dot_dimension_numbers<[1], [0], [0], [1], [0, 0, 1, 1], [], []>} : vector<16x64xbf16>, vector<64x128xbf16>, vector<16x128xf32> -> vector<16x128xf32>
    %c0_3 = arith.constant 0 : index
    %c0_4 = arith.constant 0 : index
    %3 = vector.load %arg4[%c0_3, %c0_4] : memref<1x128xf32, #tpu.memory_space<vmem>>, vector<1x128xf32>
    %4 = vector.broadcast %3 : vector<1x128xf32> to vector<16x128xf32>
    %5 = arith.addf %2, %4 : vector<16x128xf32>
    %c0_5 = arith.constant 0 : index
    %c0_6 = arith.constant 0 : index
    %6 = vector.load %arg5[%c0_5, %c0_6] : memref<16x128xbf16, #tpu.memory_space<vmem>>, vector<16x128xbf16>
    %7 = arith.extf %6 : vector<16x128xbf16> to vector<16x128xf32>
    %8 = arith.addf %5, %7 : vector<16x128xf32>
    %9 = arith.truncf %8 : vector<16x128xf32> to vector<16x128xbf16>
    %c0_7 = arith.constant 0 : index
    %c0_8 = arith.constant 0 : index
    %10 = vector.load %arg6[%c0_7, %c0_8] : memref<16x128xbf16, #tpu.memory_space<vmem>>, vector<16x128xbf16>
    tpu.vector_store %arg6[%c0_7, %c0_8], %9 {strides = array<i32>} : memref<16x128xbf16, #tpu.memory_space<vmem>>, vector<16x128xbf16>,
    return
  }
  func.func @transform_0(%arg0: i32, %arg1: i32) -> (i32, i32) {
    %c0_i32 = arith.constant 0 : i32
    %c0_i32_0 = arith.constant 0 : i32
    return %arg0, %c0_i32 : i32, i32
  }
  func.func @transform_1(%arg0: i32, %arg1: i32) -> (i32, i32) {
    %c0_i32 = arith.constant 0 : i32
    %c0_i32_0 = arith.constant 0 : i32
    return %c0_i32, %arg1 : i32, i32
  }
  func.func @transform_2(%arg0: i32, %arg1: i32) -> (i32, i32) {
    %c0_i32 = arith.constant 0 : i32
    %c0_i32_0 = arith.constant 0 : i32
    return %c0_i32, %arg1 : i32, i32
  }
  func.func @transform_3(%arg0: i32, %arg1: i32) -> (i32, i32) {
    %c0_i32 = arith.constant 0 : i32
    return %arg0, %arg1 : i32, i32
  }
  func.func @transform_4(%arg0: i32, %arg1: i32) -> (i32, i32) {
    %c0_i32 = arith.constant 0 : i32
    return %arg0, %arg1 : i32, i32
  }
}

module attributes {stable_mosaic.version = 11 : i64} {
  func.func @ln_mlp_residual_kernel(%arg0: i32, %arg1: i32, %arg2: memref<16x64xbf16, #tpu.memory_space<vmem>>, %arg3: memref<1x64xf32, #tpu.memory_space<vmem>>, %arg4: memref<1x64xf32, #tpu.memory_space<vmem>>, %arg5: memref<64x256xbf16, #tpu.memory_space<vmem>>, %arg6: memref<1x256xf32, #tpu.memory_space<vmem>>, %arg7: memref<256x64xbf16, #tpu.memory_space<vmem>>, %arg8: memref<1x64xf32, #tpu.memory_space<vmem>>, %arg9: memref<16x64xbf16, #tpu.memory_space<vmem>>, %arg10: memref<16x64xf32, #tpu.memory_space<vmem>>) attributes {dimension_semantics = [#tpu.dimension_semantics<parallel>, #tpu.dimension_semantics<arbitrary>], iteration_bounds = array<i64: 1, 1>, scalar_prefetch = 0 : i64, scratch_operands = 1 : i64, tpu.core_type = #tpu.core_type<tc>, window_params = [{transform_indices = @transform_0, window_bounds = array<i64: 16, 64>}, {pipeline_mode = #tpu.pipeline_mode<synchronous>, transform_indices = @transform_1, window_bounds = array<i64: 1, 64>}, {pipeline_mode = #tpu.pipeline_mode<synchronous>, transform_indices = @transform_2, window_bounds = array<i64: 1, 64>}, {transform_indices = @transform_3, window_bounds = array<i64: 64, 256>}, {transform_indices = @transform_4, window_bounds = array<i64: 1, 256>}, {transform_indices = @transform_5, window_bounds = array<i64: 256, 64>}, {pipeline_mode = #tpu.pipeline_mode<synchronous>, transform_indices = @transform_6, window_bounds = array<i64: 1, 64>}, {transform_indices = @transform_7, window_bounds = array<i64: 16, 64>}]} {
    %c0_i32 = arith.constant 0 : i32
    %0 = arith.cmpi eq, %arg1, %c0_i32 : i32
    %1 = arith.extui %0 : i1 to i32
    %c0_i32_0 = arith.constant 0 : i32
    %2 = arith.cmpi ne, %1, %c0_i32_0 : i32
    scf.if %2 {
      %cst_28 = arith.constant 0.000000e+00 : f32
      %57 = vector.broadcast %cst_28 : f32 to vector<16x64xf32>
      %c0_29 = arith.constant 0 : index
      %c0_30 = arith.constant 0 : index
      %58 = vector.load %arg10[%c0_29, %c0_30] : memref<16x64xf32, #tpu.memory_space<vmem>>, vector<16x64xf32>
      tpu.vector_store %arg10[%c0_29, %c0_30], %57 {strides = array<i32>} : memref<16x64xf32, #tpu.memory_space<vmem>>, vector<16x64xf32>,
    } else {
    }
    %c0 = arith.constant 0 : index
    %c0_1 = arith.constant 0 : index
    %3 = vector.load %arg2[%c0, %c0_1] : memref<16x64xbf16, #tpu.memory_space<vmem>>, vector<16x64xbf16>
    %c0_2 = arith.constant 0 : index
    %c0_3 = arith.constant 0 : index
    %4 = vector.load %arg3[%c0_2, %c0_3] : memref<1x64xf32, #tpu.memory_space<vmem>>, vector<1x64xf32>
    %c0_4 = arith.constant 0 : index
    %c0_5 = arith.constant 0 : index
    %5 = vector.load %arg4[%c0_4, %c0_5] : memref<1x64xf32, #tpu.memory_space<vmem>>, vector<1x64xf32>
    %6 = arith.extf %3 : vector<16x64xbf16> to vector<16x64xf32>
    %cst = arith.constant dense<0.000000e+00> : vector<16xf32>
    %7 = vector.multi_reduction <add>, %6, %cst [1] : vector<16x64xf32> to vector<16xf32>
    %8 = vector.shape_cast %7 : vector<16xf32> to vector<16x1xf32>
    %cst_6 = arith.constant 6.400000e+01 : f32
    %9 = vector.broadcast %cst_6 : f32 to vector<16x1xf32>
    %10 = arith.divf %8, %9 : vector<16x1xf32>
    %11 = vector.broadcast %10 : vector<16x1xf32> to vector<16x64xf32>
    %12 = arith.subf %6, %11 : vector<16x64xf32>
    %13 = arith.mulf %12, %12 : vector<16x64xf32>
    %cst_7 = arith.constant dense<0.000000e+00> : vector<16xf32>
    %14 = vector.multi_reduction <add>, %13, %cst_7 [1] : vector<16x64xf32> to vector<16xf32>
    %15 = vector.shape_cast %14 : vector<16xf32> to vector<16x1xf32>
    %cst_8 = arith.constant 6.400000e+01 : f32
    %16 = vector.broadcast %cst_8 : f32 to vector<16x1xf32>
    %17 = arith.divf %15, %16 : vector<16x1xf32>
    %18 = vector.broadcast %10 : vector<16x1xf32> to vector<16x64xf32>
    %19 = arith.subf %6, %18 : vector<16x64xf32>
    %cst_9 = arith.constant 9.99999974E-6 : f32
    %20 = vector.broadcast %cst_9 : f32 to vector<16x1xf32>
    %21 = arith.addf %17, %20 : vector<16x1xf32>
    %22 = math.rsqrt %21 : vector<16x1xf32>
    %23 = vector.broadcast %22 : vector<16x1xf32> to vector<16x64xf32>
    %24 = arith.mulf %19, %23 : vector<16x64xf32>
    %25 = vector.broadcast %4 : vector<1x64xf32> to vector<16x64xf32>
    %26 = arith.mulf %24, %25 : vector<16x64xf32>
    %27 = vector.broadcast %5 : vector<1x64xf32> to vector<16x64xf32>
    %28 = arith.addf %26, %27 : vector<16x64xf32>
    %29 = arith.truncf %28 : vector<16x64xf32> to vector<16x64xbf16>
    %c0_10 = arith.constant 0 : index
    %c0_11 = arith.constant 0 : index
    %30 = vector.load %arg5[%c0_10, %c0_11] : memref<64x256xbf16, #tpu.memory_space<vmem>>, vector<64x256xbf16>
    %cst_12 = arith.constant dense<0.000000e+00> : vector<16x256xf32>
    %31 = tpu.matmul %29, %30, %cst_12 {dimension_numbers = #tpu.dot_dimension_numbers<[1], [0], [0], [1], [0, 0, 1, 1], [], []>} : vector<16x64xbf16>, vector<64x256xbf16>, vector<16x256xf32> -> vector<16x256xf32>
    %c0_13 = arith.constant 0 : index
    %c0_14 = arith.constant 0 : index
    %32 = vector.load %arg6[%c0_13, %c0_14] : memref<1x256xf32, #tpu.memory_space<vmem>>, vector<1x256xf32>
    %33 = vector.broadcast %32 : vector<1x256xf32> to vector<16x256xf32>
    %34 = arith.addf %31, %33 : vector<16x256xf32>
    %cst_15 = arith.constant 5.000000e-01 : f32
    %35 = vector.broadcast %cst_15 : f32 to vector<16x256xf32>
    %36 = arith.mulf %35, %34 : vector<16x256xf32>
    %cst_16 = arith.constant 4.471500e-02 : f32
    %37 = vector.broadcast %cst_16 : f32 to vector<16x256xf32>
    %38 = arith.mulf %37, %34 : vector<16x256xf32>
    %39 = arith.mulf %38, %34 : vector<16x256xf32>
    %40 = arith.mulf %39, %34 : vector<16x256xf32>
    %41 = arith.addf %34, %40 : vector<16x256xf32>
    %cst_17 = arith.constant 0.797884583 : f32
    %42 = vector.broadcast %cst_17 : f32 to vector<16x256xf32>
    %43 = arith.mulf %42, %41 : vector<16x256xf32>
    %44 = math.tanh %43 : vector<16x256xf32>
    %cst_18 = arith.constant 1.000000e+00 : f32
    %45 = vector.broadcast %cst_18 : f32 to vector<16x256xf32>
    %46 = arith.addf %45, %44 : vector<16x256xf32>
    %47 = arith.mulf %36, %46 : vector<16x256xf32>
    %c0_19 = arith.constant 0 : index
    %c0_20 = arith.constant 0 : index
    %48 = vector.load %arg10[%c0_19, %c0_20] : memref<16x64xf32, #tpu.memory_space<vmem>>, vector<16x64xf32>
    %49 = arith.truncf %47 : vector<16x256xf32> to vector<16x256xbf16>
    %c0_21 = arith.constant 0 : index
    %c0_22 = arith.constant 0 : index
    %50 = vector.load %arg7[%c0_21, %c0_22] : memref<256x64xbf16, #tpu.memory_space<vmem>>, vector<256x64xbf16>
    %cst_23 = arith.constant dense<0.000000e+00> : vector<16x64xf32>
    %51 = tpu.matmul %49, %50, %cst_23 {dimension_numbers = #tpu.dot_dimension_numbers<[1], [0], [0], [1], [0, 0, 1, 1], [], []>} : vector<16x256xbf16>, vector<256x64xbf16>, vector<16x64xf32> -> vector<16x64xf32>
    %52 = arith.addf %48, %51 : vector<16x64xf32>
    %c0_24 = arith.constant 0 : index
    %c0_25 = arith.constant 0 : index
    %53 = vector.load %arg10[%c0_24, %c0_25] : memref<16x64xf32, #tpu.memory_space<vmem>>, vector<16x64xf32>
    tpu.vector_store %arg10[%c0_24, %c0_25], %52 {strides = array<i32>} : memref<16x64xf32, #tpu.memory_space<vmem>>, vector<16x64xf32>,
    %c0_i32_26 = arith.constant 0 : i32
    %54 = arith.cmpi eq, %arg1, %c0_i32_26 : i32
    %55 = arith.extui %54 : i1 to i32
    %c0_i32_27 = arith.constant 0 : i32
    %56 = arith.cmpi ne, %55, %c0_i32_27 : i32
    scf.if %56 {
      %c0_28 = arith.constant 0 : index
      %c0_29 = arith.constant 0 : index
      %57 = vector.load %arg10[%c0_28, %c0_29] : memref<16x64xf32, #tpu.memory_space<vmem>>, vector<16x64xf32>
      %c0_30 = arith.constant 0 : index
      %c0_31 = arith.constant 0 : index
      %58 = vector.load %arg8[%c0_30, %c0_31] : memref<1x64xf32, #tpu.memory_space<vmem>>, vector<1x64xf32>
      %59 = vector.broadcast %58 : vector<1x64xf32> to vector<16x64xf32>
      %60 = arith.addf %57, %59 : vector<16x64xf32>
      %c0_32 = arith.constant 0 : index
      %c0_33 = arith.constant 0 : index
      %61 = vector.load %arg2[%c0_32, %c0_33] : memref<16x64xbf16, #tpu.memory_space<vmem>>, vector<16x64xbf16>
      %62 = arith.extf %61 : vector<16x64xbf16> to vector<16x64xf32>
      %63 = arith.addf %60, %62 : vector<16x64xf32>
      %64 = arith.truncf %63 : vector<16x64xf32> to vector<16x64xbf16>
      %c0_34 = arith.constant 0 : index
      %c0_35 = arith.constant 0 : index
      %65 = vector.load %arg9[%c0_34, %c0_35] : memref<16x64xbf16, #tpu.memory_space<vmem>>, vector<16x64xbf16>
      tpu.vector_store %arg9[%c0_34, %c0_35], %64 {strides = array<i32>} : memref<16x64xbf16, #tpu.memory_space<vmem>>, vector<16x64xbf16>,
    } else {
    }
    return
  }
  func.func @transform_0(%arg0: i32, %arg1: i32) -> (i32, i32) {
    %c0_i32 = arith.constant 0 : i32
    %c0_i32_0 = arith.constant 0 : i32
    return %arg0, %c0_i32 : i32, i32
  }
  func.func @transform_1(%arg0: i32, %arg1: i32) -> (i32, i32) {
    %c0_i32 = arith.constant 0 : i32
    %c0_i32_0 = arith.constant 0 : i32
    %c0_i32_1 = arith.constant 0 : i32
    return %c0_i32, %c0_i32_0 : i32, i32
  }
  func.func @transform_2(%arg0: i32, %arg1: i32) -> (i32, i32) {
    %c0_i32 = arith.constant 0 : i32
    %c0_i32_0 = arith.constant 0 : i32
    %c0_i32_1 = arith.constant 0 : i32
    return %c0_i32, %c0_i32_0 : i32, i32
  }
  func.func @transform_3(%arg0: i32, %arg1: i32) -> (i32, i32) {
    %c0_i32 = arith.constant 0 : i32
    %c0_i32_0 = arith.constant 0 : i32
    return %c0_i32, %arg1 : i32, i32
  }
  func.func @transform_4(%arg0: i32, %arg1: i32) -> (i32, i32) {
    %c0_i32 = arith.constant 0 : i32
    %c0_i32_0 = arith.constant 0 : i32
    return %c0_i32, %arg1 : i32, i32
  }
  func.func @transform_5(%arg0: i32, %arg1: i32) -> (i32, i32) {
    %c0_i32 = arith.constant 0 : i32
    %c0_i32_0 = arith.constant 0 : i32
    return %arg1, %c0_i32 : i32, i32
  }
  func.func @transform_6(%arg0: i32, %arg1: i32) -> (i32, i32) {
    %c0_i32 = arith.constant 0 : i32
    %c0_i32_0 = arith.constant 0 : i32
    %c0_i32_1 = arith.constant 0 : i32
    return %c0_i32, %c0_i32_0 : i32, i32
  }
  func.func @transform_7(%arg0: i32, %arg1: i32) -> (i32, i32) {
    %c0_i32 = arith.constant 0 : i32
    %c0_i32_0 = arith.constant 0 : i32
    return %arg0, %c0_i32 : i32, i32
  }
}

module attributes {stable_mosaic.version = 11 : i64} {
  func.func @ln_linear_nobias_kernel(%arg0: i32, %arg1: i32, %arg2: memref<16x64xbf16, #tpu.memory_space<vmem>>, %arg3: memref<1x64xf32, #tpu.memory_space<vmem>>, %arg4: memref<1x64xf32, #tpu.memory_space<vmem>>, %arg5: memref<64x128xbf16, #tpu.memory_space<vmem>>, %arg6: memref<16x128xf32, #tpu.memory_space<vmem>>) attributes {dimension_semantics = [#tpu.dimension_semantics<parallel>, #tpu.dimension_semantics<parallel>], iteration_bounds = array<i64: 1, 1>, scalar_prefetch = 0 : i64, scratch_operands = 0 : i64, tpu.core_type = #tpu.core_type<tc>, window_params = [{transform_indices = @transform_0, window_bounds = array<i64: 16, 64>}, {pipeline_mode = #tpu.pipeline_mode<synchronous>, transform_indices = @transform_1, window_bounds = array<i64: 1, 64>}, {pipeline_mode = #tpu.pipeline_mode<synchronous>, transform_indices = @transform_2, window_bounds = array<i64: 1, 64>}, {transform_indices = @transform_3, window_bounds = array<i64: 64, 128>}, {transform_indices = @transform_4, window_bounds = array<i64: 16, 128>}]} {
    %c0 = arith.constant 0 : index
    %c0_0 = arith.constant 0 : index
    %0 = vector.load %arg2[%c0, %c0_0] : memref<16x64xbf16, #tpu.memory_space<vmem>>, vector<16x64xbf16>
    %c0_1 = arith.constant 0 : index
    %c0_2 = arith.constant 0 : index
    %1 = vector.load %arg3[%c0_1, %c0_2] : memref<1x64xf32, #tpu.memory_space<vmem>>, vector<1x64xf32>
    %c0_3 = arith.constant 0 : index
    %c0_4 = arith.constant 0 : index
    %2 = vector.load %arg4[%c0_3, %c0_4] : memref<1x64xf32, #tpu.memory_space<vmem>>, vector<1x64xf32>
    %3 = arith.extf %0 : vector<16x64xbf16> to vector<16x64xf32>
    %cst = arith.constant dense<0.000000e+00> : vector<16xf32>
    %4 = vector.multi_reduction <add>, %3, %cst [1] : vector<16x64xf32> to vector<16xf32>
    %5 = vector.shape_cast %4 : vector<16xf32> to vector<16x1xf32>
    %cst_5 = arith.constant 6.400000e+01 : f32
    %6 = vector.broadcast %cst_5 : f32 to vector<16x1xf32>
    %7 = arith.divf %5, %6 : vector<16x1xf32>
    %8 = vector.broadcast %7 : vector<16x1xf32> to vector<16x64xf32>
    %9 = arith.subf %3, %8 : vector<16x64xf32>
    %10 = arith.mulf %9, %9 : vector<16x64xf32>
    %cst_6 = arith.constant dense<0.000000e+00> : vector<16xf32>
    %11 = vector.multi_reduction <add>, %10, %cst_6 [1] : vector<16x64xf32> to vector<16xf32>
    %12 = vector.shape_cast %11 : vector<16xf32> to vector<16x1xf32>
    %cst_7 = arith.constant 6.400000e+01 : f32
    %13 = vector.broadcast %cst_7 : f32 to vector<16x1xf32>
    %14 = arith.divf %12, %13 : vector<16x1xf32>
    %15 = vector.broadcast %7 : vector<16x1xf32> to vector<16x64xf32>
    %16 = arith.subf %3, %15 : vector<16x64xf32>
    %cst_8 = arith.constant 9.99999974E-6 : f32
    %17 = vector.broadcast %cst_8 : f32 to vector<16x1xf32>
    %18 = arith.addf %14, %17 : vector<16x1xf32>
    %19 = math.rsqrt %18 : vector<16x1xf32>
    %20 = vector.broadcast %19 : vector<16x1xf32> to vector<16x64xf32>
    %21 = arith.mulf %16, %20 : vector<16x64xf32>
    %22 = vector.broadcast %1 : vector<1x64xf32> to vector<16x64xf32>
    %23 = arith.mulf %21, %22 : vector<16x64xf32>
    %24 = vector.broadcast %2 : vector<1x64xf32> to vector<16x64xf32>
    %25 = arith.addf %23, %24 : vector<16x64xf32>
    %26 = arith.truncf %25 : vector<16x64xf32> to vector<16x64xbf16>
    %c0_9 = arith.constant 0 : index
    %c0_10 = arith.constant 0 : index
    %27 = vector.load %arg5[%c0_9, %c0_10] : memref<64x128xbf16, #tpu.memory_space<vmem>>, vector<64x128xbf16>
    %cst_11 = arith.constant dense<0.000000e+00> : vector<16x128xf32>
    %28 = tpu.matmul %26, %27, %cst_11 {dimension_numbers = #tpu.dot_dimension_numbers<[1], [0], [0], [1], [0, 0, 1, 1], [], []>} : vector<16x64xbf16>, vector<64x128xbf16>, vector<16x128xf32> -> vector<16x128xf32>
    %c0_12 = arith.constant 0 : index
    %c0_13 = arith.constant 0 : index
    %29 = vector.load %arg6[%c0_12, %c0_13] : memref<16x128xf32, #tpu.memory_space<vmem>>, vector<16x128xf32>
    tpu.vector_store %arg6[%c0_12, %c0_13], %28 {strides = array<i32>} : memref<16x128xf32, #tpu.memory_space<vmem>>, vector<16x128xf32>,
    return
  }
  func.func @transform_0(%arg0: i32, %arg1: i32) -> (i32, i32) {
    %c0_i32 = arith.constant 0 : i32
    %c0_i32_0 = arith.constant 0 : i32
    return %arg0, %c0_i32 : i32, i32
  }
  func.func @transform_1(%arg0: i32, %arg1: i32) -> (i32, i32) {
    %c0_i32 = arith.constant 0 : i32
    %c0_i32_0 = arith.constant 0 : i32
    %c0_i32_1 = arith.constant 0 : i32
    return %c0_i32, %c0_i32_0 : i32, i32
  }
  func.func @transform_2(%arg0: i32, %arg1: i32) -> (i32, i32) {
    %c0_i32 = arith.constant 0 : i32
    %c0_i32_0 = arith.constant 0 : i32
    %c0_i32_1 = arith.constant 0 : i32
    return %c0_i32, %c0_i32_0 : i32, i32
  }
  func.func @transform_3(%arg0: i32, %arg1: i32) -> (i32, i32) {
    %c0_i32 = arith.constant 0 : i32
    %c0_i32_0 = arith.constant 0 : i32
    return %c0_i32, %arg1 : i32, i32
  }
  func.func @transform_4(%arg0: i32, %arg1: i32) -> (i32, i32) {
    %c0_i32 = arith.constant 0 : i32
    return %arg0, %arg1 : i32, i32
  }
}

</mosaic_0001>

<llo_original>
// kernel: _lambda_.10
$region0: #{_lambda_.10}
  #allocation0 [shape = 'u32[]', space=smem, size = 0x4, offset = 0x4, fixed_abs, tag = 'smem constant byte address 0x4 - core index']
  #allocation1 [shape = 'u32[144,128]{1,0:T(1,128)}', space=vmem, size = 0x12000, scoped, tag = 'internal scratch']
  #allocation2 [shape = 'f32[8,1]{1,0:T(8,128)}', space=vmem, size = 0x1000, scoped, tag = 'scratch operand']
  #allocation3 [shape = 'f32[8,1]{1,0:T(8,128)}', space=vmem, size = 0x1000, scoped, tag = 'scratch operand']
  #allocation4 [shape = 'f32[8,16]{1,0:T(8,128)}', space=vmem, size = 0x1000, scoped, tag = 'scratch operand']
  %s0 = inlined_call_operand.vmem [shape: bf16[8,8,16], index: 0, kind: input, shape index: {}]
  %s1 = inlined_call_operand.vmem [shape: bf16[8,8,16], index: 1, kind: input, shape index: {}]
  %s2 = inlined_call_operand.vmem [shape: bf16[8,8,16], index: 2, kind: input, shape index: {}]
  %s3 = inlined_call_operand.vmem [shape: bf16[8,8,16], index: 3, kind: output, shape index: {}]
  %s4 = sld [smem:[#allocation0]]
  $region57: #{_lambda_.10} parent=0
    _
  %s6 = ssub.s32 1, %s4
  %s7 = scalar_select 0, %s6, %s4
  loop: start=0, step=1, limit=10
  $region2: #{_lambda_.10} parent=0 // loop_pre_header
    _
  $region3: #{_lambda_.10} parent=0 // loop_header
    %s9 = sphi 0, %s13
    %p10 = scmp.ge.s32.totalorder %s9, 10
    %s16 = sphi 0, %s35
    %s17 = sphi 0, %s31
    %s18 = sphi 0, %s27
    %s19 = sphi 0, %s16
    %s20 = sphi 0, %s17
    %s21 = sphi 0, %s18
    %s22 = sphi 0, %s19
    %s23 = sphi 0, %s20
    %s24 = sphi 0, %s21
    %s40 = sphi 0, %s42
    %s43 = sphi 0, %s40
    %s44 = sphi 0, %s43
    %s60 = sphi 0, %s44
    %s72 = sphi 0, %s74
    %s75 = sphi 0, %s72
    %s76 = sphi 0, %s75
    %s92 = sphi 0, %s76
    %s104 = sphi 0, %s106
    %s107 = sphi 0, %s104
    %s108 = sphi 0, %s107
    %s124 = sphi 0, %s108
    %s132 = sphi 0, %s134
    %s135 = sphi 0, %s132
    %s136 = sphi 0, %s135
    %s152 = sphi 0, %s136
  $region4: #{_lambda_.10} parent=0 // loop_header_branch
    %12 = sbr.rel (%p10) target = $region8
  $region5: #{_lambda_.10} parent=0 // loop_body
    %s14 = ssub.s32 %s9, 1
    %s15 = ssub.s32 %s9, 2
    %s25 = sadd.s32 1, %s18
    %p26 = scmp.ge.s32.totalorder %s25, 1
    %s27 = scalar_select %p26, 0, %s25
    %s28 = sadd.s32 1, %s17
    %s29 = scalar_select %p26, %s28, %s17
    %p30 = scmp.ge.s32.totalorder %s29, 1
    %s31 = scalar_select %p30, 0, %s29
    %s32 = sadd.s32 1, %s16
    %s33 = scalar_select %p30, %s32, %s16
    %p34 = scmp.ge.s32.totalorder %s33, 8
    %s35 = scalar_select %p34, 0, %s33
    %s36 = ssub.s32 %s16, %s35
    %s37 = ssub.s32 %s17, %s31
    %s38 = sor.u32 %s36, %s37
    %p39 = scmp.eq.s32.totalorder %s38, 0
    %s41 = sadd.s32 %s40, 1
    %s42 = scalar_select %p39, %s40, %s41
    %p45 = pneg %p39
    %p46 = scmp.eq.s32.totalorder %s9, 7
    %p47 = por %p45, %p46
    %p48 = scmp.ne.s32.totalorder %s40, %s43
    %p49 = scmp.eq.s32.totalorder %s9, 0
    %p50 = por %p48, %p49
    %p51 = scmp.ne.s32.totalorder %s40, %s43
    %p52 = scmp.eq.s32.totalorder %s14, 7
    %p53 = por %p51, %p52
    %p54 = scmp.ne.s32.totalorder %s43, %s44
    %p55 = scmp.eq.s32.totalorder %s14, 0
    %p56 = por %p54, %p55
    %p57 = scmp.ne.s32.totalorder %s43, %s44
    %p58 = scmp.eq.s32.totalorder %s15, 7
    %p59 = por %p57, %p58
    %p61 = scmp.ne.s32.totalorder %s44, %s60
    %p62 = scmp.eq.s32.totalorder %s15, 0
    %p63 = por %p61, %p62
    %p64 = scmp.lt.s32.totalorder %s17, %s18
    %s65 = scalar_select %p64, %s17, %s18
    %p66 = scmp.lt.s32.totalorder %s31, %s27
    %s67 = scalar_select %p66, %s31, %s27
    %s68 = ssub.s32 %s16, %s35
    %s69 = ssub.s32 %s65, %s67
    %s70 = sor.u32 %s68, %s69
    %p71 = scmp.eq.s32.totalorder %s70, 0
    %s73 = sadd.s32 %s72, 1
    %s74 = scalar_select %p71, %s72, %s73
    %p77 = pneg %p71
    %p78 = scmp.eq.s32.totalorder %s9, 7
    %p79 = por %p77, %p78
    %p80 = scmp.ne.s32.totalorder %s72, %s75
    %p81 = scmp.eq.s32.totalorder %s9, 0
    %p82 = por %p80, %p81
    %p83 = scmp.ne.s32.totalorder %s72, %s75
    %p84 = scmp.eq.s32.totalorder %s14, 7
    %p85 = por %p83, %p84
    %p86 = scmp.ne.s32.totalorder %s75, %s76
    %p87 = scmp.eq.s32.totalorder %s14, 0
    %p88 = por %p86, %p87
    %p89 = scmp.ne.s32.totalorder %s75, %s76
    %p90 = scmp.eq.s32.totalorder %s15, 7
    %p91 = por %p89, %p90
    %p93 = scmp.ne.s32.totalorder %s76, %s92
    %p94 = scmp.eq.s32.totalorder %s15, 0
    %p95 = por %p93, %p94
    %p96 = scmp.lt.s32.totalorder %s17, %s18
    %s97 = scalar_select %p96, %s17, %s18
    %p98 = scmp.lt.s32.totalorder %s31, %s27
    %s99 = scalar_select %p98, %s31, %s27
    %s100 = ssub.s32 %s16, %s35
    %s101 = ssub.s32 %s97, %s99
    %s102 = sor.u32 %s100, %s101
    %p103 = scmp.eq.s32.totalorder %s102, 0
    %s105 = sadd.s32 %s104, 1
    %s106 = scalar_select %p103, %s104, %s105
    %p109 = pneg %p103
    %p110 = scmp.eq.s32.totalorder %s9, 7
    %p111 = por %p109, %p110
    %p112 = scmp.ne.s32.totalorder %s104, %s107
    %p113 = scmp.eq.s32.totalorder %s9, 0
    %p114 = por %p112, %p113
    %p115 = scmp.ne.s32.totalorder %s104, %s107
    %p116 = scmp.eq.s32.totalorder %s14, 7
    %p117 = por %p115, %p116
    %p118 = scmp.ne.s32.totalorder %s107, %s108
    %p119 = scmp.eq.s32.totalorder %s14, 0
    %p120 = por %p118, %p119
    %p121 = scmp.ne.s32.totalorder %s107, %s108
    %p122 = scmp.eq.s32.totalorder %s15, 7
    %p123 = por %p121, %p122
    %p125 = scmp.ne.s32.totalorder %s108, %s124
    %p126 = scmp.eq.s32.totalorder %s15, 0
    %p127 = por %p125, %p126
    %s128 = ssub.s32 %s16, %s35
    %s129 = ssub.s32 %s17, %s31
    %s130 = sor.u32 %s128, %s129
    %p131 = scmp.eq.s32.totalorder %s130, 0
    %s133 = sadd.s32 %s132, 1
    %s134 = scalar_select %p131, %s132, %s133
    %p137 = pneg %p131
    %p138 = scmp.eq.s32.totalorder %s9, 7
    %p139 = por %p137, %p138
    %p140 = scmp.ne.s32.totalorder %s132, %s135
    %p141 = scmp.eq.s32.totalorder %s9, 0
    %p142 = por %p140, %p141
    %p143 = scmp.ne.s32.totalorder %s132, %s135
    %p144 = scmp.eq.s32.totalorder %s14, 7
    %p145 = por %p143, %p144
    %p146 = scmp.ne.s32.totalorder %s135, %s136
    %p147 = scmp.eq.s32.totalorder %s14, 0
    %p148 = por %p146, %p147
    %p149 = scmp.ne.s32.totalorder %s135, %s136
    %p150 = scmp.eq.s32.totalorder %s15, 7
    %p151 = por %p149, %p150
    %p153 = scmp.ne.s32.totalorder %s136, %s152
    %p154 = scmp.eq.s32.totalorder %s15, 0
    %p155 = por %p153, %p154
    %p156 = scmp.le.s32.totalorder 1, %s9
    %p157 = scmp.lt.s32.totalorder %s9, 9
    %p158 = pnand %p156, %p157
    %p159 = pneg %p158
    // Predicated region
    $region9: #{_lambda_.10} parent=5 // pred_check
      _
    $region10: #{_lambda_.10} parent=5 // pred_check_branch
      %161 = sbr.rel (%p158) target = $region12
    $region11: #{_lambda_.10} parent=5 // pred_region
      %s162 = ssub.s32 %s9, 1
    $region12: #{_lambda_.10} parent=5 // pred_fallthru
      _
    %p163 = scmp.lt.s32.totalorder %s9, 8
    // Predicated region
    $region13: #{_lambda_.10} parent=5 // pred_check
      %p164 = pneg %p163
    $region14: #{_lambda_.10} parent=5 // pred_check_branch
      %166 = sbr.rel (%p164) target = $region16
    $region15: #{_lambda_.10} parent=5 // pred_region
      // Predicated region
      $region17: #{_lambda_.10} parent=15 // pred_check
        %p167 = pneg %p50
      $region18: #{_lambda_.10} parent=15 // pred_check_branch
        %169 = sbr.rel (%p167) target = $region20
      $region19: #{_lambda_.10} parent=15 // pred_region
        %p170 = scmp.lt.s32.totalorder %s16, 7
        %s171 = scalar_select %p170, %s16, 7
        %p172 = scmp.lt.s32.totalorder %s17, 0
        %s173 = scalar_select %p172, %s17, 0
        %s174 = sadd.s32 %s173, %s171
        %s175 = smul.addr %s174, 4
        %s176 = scalar_lea.vmem %s0, %s175
      $region20: #{_lambda_.10} parent=15 // pred_fallthru
        _
      // Predicated region
      $region21: #{_lambda_.10} parent=15 // pred_check
        %p177 = pneg %p82
      $region22: #{_lambda_.10} parent=15 // pred_check_branch
        %179 = sbr.rel (%p177) target = $region24
      $region23: #{_lambda_.10} parent=15 // pred_region
        %p180 = scmp.lt.s32.totalorder %s17, %s18
        %s181 = scalar_select %p180, %s17, %s18
        %p182 = scmp.lt.s32.totalorder %s16, 7
        %s183 = scalar_select %p182, %s16, 7
        %p184 = scmp.lt.s32.totalorder %s181, 0
        %s185 = scalar_select %p184, %s181, 0
        %s186 = sadd.s32 %s185, %s183
        %s187 = smul.addr %s186, 4
        %s188 = scalar_lea.vmem %s1, %s187
        %p189 = scmp.lt.s32.totalorder %s17, %s18
        %s190 = scalar_select %p189, %s17, %s18
      $region24: #{_lambda_.10} parent=15 // pred_fallthru
        _
      // Predicated region
      $region25: #{_lambda_.10} parent=15 // pred_check
        %p191 = pneg %p114
      $region26: #{_lambda_.10} parent=15 // pred_check_branch
        %193 = sbr.rel (%p191) target = $region28
      $region27: #{_lambda_.10} parent=15 // pred_region
        %p194 = scmp.lt.s32.totalorder %s17, %s18
        %s195 = scalar_select %p194, %s17, %s18
        %p196 = scmp.lt.s32.totalorder %s16, 7
        %s197 = scalar_select %p196, %s16, 7
        %p198 = scmp.lt.s32.totalorder %s195, 0
        %s199 = scalar_select %p198, %s195, 0
        %s200 = sadd.s32 %s199, %s197
        %s201 = smul.addr %s200, 4
        %s202 = scalar_lea.vmem %s2, %s201
        %p203 = scmp.lt.s32.totalorder %s17, %s18
        %s204 = scalar_select %p203, %s17, %s18
      $region28: #{_lambda_.10} parent=15 // pred_fallthru
        _
    $region16: #{_lambda_.10} parent=5 // pred_fallthru
      _
    %p205 = scmp.le.s32.totalorder 1, %s9
    %p206 = scmp.lt.s32.totalorder %s9, 9
    %p207 = pnand %p205, %p206
    %p208 = pneg %p207
    // Predicated region
    $region29: #{_lambda_.10} parent=5 // pred_check
      _
    $region30: #{_lambda_.10} parent=5 // pred_check_branch
      %210 = sbr.rel (%p207) target = $region32
    $region31: #{_lambda_.10} parent=5 // pred_region
      %s211 = ssub.s32 %s9, 1
      %p212 = scmp.lt.s32.totalorder %s19, 7
      %s213 = scalar_select %p212, %s19, 7
      %p214 = scmp.lt.s32.totalorder %s20, 0
      %s215 = scalar_select %p214, %s20, 0
      %s216 = sadd.s32 %s215, %s213
      %s217 = smul.addr %s216, 4
      %s218 = scalar_lea.vmem %s0, %s217
      %p219 = pneg %p56
      %p220 = pneg %p53
      %p221 = scmp.lt.s32.totalorder %s20, %s21
      %s222 = scalar_select %p221, %s20, %s21
      %p223 = scmp.lt.s32.totalorder %s19, 7
      %s224 = scalar_select %p223, %s19, 7
      %p225 = scmp.lt.s32.totalorder %s222, 0
      %s226 = scalar_select %p225, %s222, 0
      %s227 = sadd.s32 %s226, %s224
      %s228 = smul.addr %s227, 4
      %s229 = scalar_lea.vmem %s1, %s228
      %p230 = pneg %p88
      %p231 = pneg %p85
      %p232 = scmp.lt.s32.totalorder %s20, %s21
      %s233 = scalar_select %p232, %s20, %s21
      %p234 = scmp.lt.s32.totalorder %s19, 7
      %s235 = scalar_select %p234, %s19, 7
      %p236 = scmp.lt.s32.totalorder %s233, 0
      %s237 = scalar_select %p236, %s233, 0
      %s238 = sadd.s32 %s237, %s235
      %s239 = smul.addr %s238, 4
      %s240 = scalar_lea.vmem %s2, %s239
      %p241 = pneg %p120
      %p242 = pneg %p117
      %p243 = pneg %p148
      %p244 = pneg %p145
      %p245 = scmp.lt.s32.totalorder %s19, 7
      %s246 = scalar_select %p245, %s19, 7
      %p247 = scmp.lt.s32.totalorder %s20, 0
      %s248 = scalar_select %p247, %s20, 0
      %s249 = sadd.s32 %s248, %s246
      %s250 = smul.addr %s249, 4
      %s251 = scalar_lea.vmem %s3, %s250
      %p252 = scmp.lt.s32.totalorder %s19, 7
      %s253 = scalar_select %p252, %s19, 7
      %p254 = scmp.lt.s32.totalorder %s20, 0
      %s255 = scalar_select %p254, %s20, 0
      %s256 = sadd.s32 %s255, %s253
      %s257 = smul.addr %s256, 4
      %s258 = scalar_lea.vmem %s0, %s257
      %p259 = scmp.lt.s32.totalorder %s20, %s21
      %s260 = scalar_select %p259, %s20, %s21
      %p261 = scmp.lt.s32.totalorder %s19, 7
      %s262 = scalar_select %p261, %s19, 7
      %p263 = scmp.lt.s32.totalorder %s260, 0
      %s264 = scalar_select %p263, %s260, 0
      %s265 = sadd.s32 %s264, %s262
      %s266 = smul.addr %s265, 4
      %s267 = scalar_lea.vmem %s1, %s266
      %p268 = scmp.lt.s32.totalorder %s20, %s21
      %s269 = scalar_select %p268, %s20, %s21
      %p270 = scmp.lt.s32.totalorder %s20, %s21
      %s271 = scalar_select %p270, %s20, %s21
      %p272 = scmp.lt.s32.totalorder %s19, 7
      %s273 = scalar_select %p272, %s19, 7
      %p274 = scmp.lt.s32.totalorder %s271, 0
      %s275 = scalar_select %p274, %s271, 0
      %s276 = sadd.s32 %s275, %s273
      %s277 = smul.addr %s276, 4
      %s278 = scalar_lea.vmem %s2, %s277
      %p279 = scmp.lt.s32.totalorder %s20, %s21
      %s280 = scalar_select %p279, %s20, %s21
      %p281 = scmp.lt.s32.totalorder %s19, 7
      %s282 = scalar_select %p281, %s19, 7
      %p283 = scmp.lt.s32.totalorder %s20, 0
      %s284 = scalar_select %p283, %s20, 0
      %s285 = sadd.s32 %s284, %s282
      %s286 = smul.addr %s285, 4
      %s287 = scalar_lea.vmem %s3, %s286
      %p289 = scmp.eq.s32.totalorder %s21, 0
      // Predicated region
      $region33: #{_lambda_.10} parent=31 // pred_check
        %p290 = pneg %p289
      $region34: #{_lambda_.10} parent=31 // pred_check_branch
        %292 = sbr.rel (%p290) target = $region36
      $region35: #{_lambda_.10} parent=31 // pred_region
        %vm293 = vcmask 7168
        %294 = vst.msk [vmem:[#allocation2] sm:$0xff] %vm293, -inf
        %295 = vst.msk [vmem:[#allocation3] sm:$0xff] %vm293, 0.0
        %vm296 = vcmask 130048
        %297 = vst.msk [vmem:[#allocation4] sm:$0xff] %vm296, 0.0
      $region36: #{_lambda_.10} parent=31 // pred_fallthru
        _
      %p298 = scmp.le.s32.totalorder %s21, %s20
      // Predicated region
      $region37: #{_lambda_.10} parent=31 // pred_check
        %p299 = pneg %p298
      $region38: #{_lambda_.10} parent=31 // pred_check_branch
        %301 = sbr.rel (%p299) target = $region40
      $region39: #{_lambda_.10} parent=31 // pred_region
        %v302 = vld [vmem:[%s258] sm:$0xf]
        %v303 = vld [vmem:[%s267] sm:$0xf]
        %vm304 = vcmask 130048
        %v306 = vsel %vm304, %v302, 0
        %v309 = vsel %vm304, %v303, 0
        %311 = vmatprep.subr.bf16.mxu0 0
        %312 = vmatpush1.bf16.xpose.msra.mxu0 0
        %313 = vmatprep.subr.bf16.mxu0 0
        %314 = vmatpush1.bf16.xpose.msra.mxu0 0
        %315 = vmatprep.subr.bf16.mxu0 0
        %316 = vmatpush1.bf16.xpose.msra.mxu0 0
        %317 = vmatprep.subr.bf16.mxu0 0
        %318 = vmatpush1.bf16.xpose.msra.mxu0 0
        %319 = vmatprep.subr.bf16.mxu0 0
        %320 = vmatpush1.bf16.xpose.msra.mxu0 0
        %321 = vmatprep.subr.bf16.mxu0 0
        %322 = vmatpush1.bf16.xpose.msra.mxu0 0
        %323 = vmatprep.subr.bf16.mxu0 0
        %324 = vmatpush1.bf16.xpose.msra.mxu0 0
        %325 = vmatprep.subr.bf16.mxu0 0
        %326 = vmatpush1.bf16.xpose.msra.mxu0 %v309
        %327 = vmatprep.subr.bf16.mxu0 0
        %328 = vmatpush2.bf16.xpose.msra.mxu0 0
        %329 = vmatprep.subr.bf16.mxu0 0
        %330 = vmatpush2.bf16.xpose.msra.mxu0 0
        %331 = vmatprep.subr.bf16.mxu0 0
        %332 = vmatpush2.bf16.xpose.msra.mxu0 0
        %333 = vmatprep.subr.bf16.mxu0 0
        %334 = vmatpush2.bf16.xpose.msra.mxu0 0
        %335 = vmatprep.subr.bf16.mxu0 0
        %336 = vmatpush2.bf16.xpose.msra.mxu0 0
        %337 = vmatprep.subr.bf16.mxu0 0
        %338 = vmatpush2.bf16.xpose.msra.mxu0 0
        %339 = vmatprep.subr.bf16.mxu0 0
        %340 = vmatpush2.bf16.xpose.msra.mxu0 0
        %341 = vmatprep.subr.bf16.mxu0 0
        %342 = vmatpush2.bf16.xpose.msra.mxu0 0
        %343 = vmatprep.mubr.bf16.mxu0 0
        %344 = vmatmul.mubr.bf16.gmra.mxu0 %v306
        %v345 = vpop.f32.mrf.mxu0
        %v346 = vadd.f32 0.0, %v345
        %v347 = vpop.f32.mrf.mxu0
        %v348 = vpop.f32.mrf.mxu0
        %v349 = vpop.f32.mrf.mxu0
        %350 = vdwg.mxu0
        %v351 = vmul.f32 %v346, 0.25
        %s352 = smul.u32 %s20, 8
        %v353 = vlaneseq
        %v354 = vshrl.u32 %v353, 7
        %v355 = vstv %s352
        %v356 = vadd.s32 %v355, %v354
        %s357 = smul.u32 %s21, 8
        %v358 = vlaneseq
        %v359 = vand.u32 %v358, 127
        %v360 = vstv %s357
        %v361 = vadd.s32 %v360, %v359
        %vm362 = vcmp.le.s32.totalorder %v361, %v356
        %v363 = vsel %vm362, %v351, -1e+30
        %v364 = vld [vmem:[#allocation2] sm:$0xff]
        %vm365 = vcmask 64512
        %v366 = vsel %vm365, %v363, -inf
        %367 = vmax.xlane.f32.xlu0 %v366
        %v368 = vpop.xlane.xlu0 %367
        %v369 = vmax.f32 %v364, %v368
        %v370 = vsub.f32 %v364, %v369
        %v371 = vmul.f32 %v370, 1.442695
        %v372 = vpow.pop %v371
        %374 = vset.pattern.permute.xlu0 0
        %375 = vperm.xlu0 %374, %v369
        %v376 = vpop.permute.xlu0 %375
        %v378 = vsub.f32 %v363, %v376
        %v379 = vmul.f32 %v378, 1.442695
        %v380 = vpow.pop %v379
        %v381 = vld [vmem:[#allocation3] sm:$0xff]
        %v382 = vmul.f32 %v372, %v381
        %v383 = vsel %vm365, %v380, 0.0
        %384 = vadd.xlane.f32.xlu0 %v383
        %v385 = vpop.xlane.xlu0 %384
        %v386 = vadd.f32 %v382, %v385
        %vm387 = vcmask 7168
        %388 = vst.msk [vmem:[#allocation3] sm:$0xff] %vm387, %v386
        %v389 = vld [vmem:[#allocation4] sm:$0xff]
        %391 = vset.pattern.permute.xlu0 0
        %392 = vperm.xlu0 %391, %v372
        %v393 = vpop.permute.xlu0 %392
        %v395 = vmul.f32 %v393, %v389
        %v396 = vpack.c.bf16 %v380, %v380
        %v397 = vld [vmem:[%s278] sm:$0xf]
        %v399 = vsel %vm365, %v396, 0
        %vm401 = vcmask 1043456
        %v403 = vsel %vm401, %v397, 0
        %405 = vmatprep.subr.bf16.mxu0 0
        %406 = vmatpush1.bf16.msra.mxu0 0
        %407 = vmatprep.subr.bf16.mxu0 0
        %408 = vmatpush1.bf16.msra.mxu0 0
        %409 = vmatprep.subr.bf16.mxu0 0
        %410 = vmatpush1.bf16.msra.mxu0 0
        %411 = vmatprep.subr.bf16.mxu0 0
        %412 = vmatpush1.bf16.msra.mxu0 0
        %413 = vmatprep.subr.bf16.mxu0 0
        %414 = vmatpush1.bf16.msra.mxu0 0
        %415 = vmatprep.subr.bf16.mxu0 0
        %416 = vmatpush1.bf16.msra.mxu0 0
        %417 = vmatprep.subr.bf16.mxu0 0
        %418 = vmatpush1.bf16.msra.mxu0 0
        %419 = vmatprep.subr.bf16.mxu0 0
        %420 = vmatpush1.bf16.msra.mxu0 %v403
        %421 = vmatprep.subr.bf16.mxu0 0
        %422 = vmatpush2.bf16.msra.mxu0 0
        %423 = vmatprep.subr.bf16.mxu0 0
        %424 = vmatpush2.bf16.msra.mxu0 0
        %425 = vmatprep.subr.bf16.mxu0 0
        %426 = vmatpush2.bf16.msra.mxu0 0
        %427 = vmatprep.subr.bf16.mxu0 0
        %428 = vmatpush2.bf16.msra.mxu0 0
        %429 = vmatprep.subr.bf16.mxu0 0
        %430 = vmatpush2.bf16.msra.mxu0 0
        %431 = vmatprep.subr.bf16.mxu0 0
        %432 = vmatpush2.bf16.msra.mxu0 0
        %433 = vmatprep.subr.bf16.mxu0 0
        %434 = vmatpush2.bf16.msra.mxu0 0
        %435 = vmatprep.subr.bf16.mxu0 0
        %436 = vmatpush2.bf16.msra.mxu0 0
        %437 = vmatprep.mubr.bf16.mxu0 0
        %438 = vmatmul.mubr.bf16.gmra.mxu0 %v399
        %v439 = vpop.f32.mrf.mxu0
        %v440 = vadd.f32 0.0, %v439
        %v441 = vpop.f32.mrf.mxu0
        %v442 = vpop.f32.mrf.mxu0
        %v443 = vpop.f32.mrf.mxu0
        %444 = vdwg.mxu0
        %v445 = vadd.f32 %v395, %v440
        %446 = vst.msk [vmem:[#allocation4] sm:$0xff] %vm304, %v445
        %447 = vst.msk [vmem:[#allocation2] sm:$0xff] %vm387, %v369
      $region40: #{_lambda_.10} parent=31 // pred_fallthru
        _
      %p448 = scmp.eq.s32.totalorder %s21, %s20
      // Predicated region
      $region41: #{_lambda_.10} parent=31 // pred_check
        %p449 = pneg %p448
      $region42: #{_lambda_.10} parent=31 // pred_check_branch
        %451 = sbr.rel (%p449) target = $region44
      $region43: #{_lambda_.10} parent=31 // pred_region
        %v452 = vld [vmem:[#allocation3] sm:$0xff]
        %v453 = vrcp.pop %v452
        %v454 = vld [vmem:[#allocation4] sm:$0xff]
        %456 = vset.pattern.permute.xlu0 0
        %457 = vperm.xlu0 %456, %v453
        %v458 = vpop.permute.xlu0 %457
        %v460 = vmul.f32 %v454, %v458
        %v461 = vpack.c.bf16 %v460, %v460
        %vm462 = vcmask 125952
        %463 = vst.msk [vmem:[%s287] sm:$0xf] %vm462, %v461
      $region44: #{_lambda_.10} parent=31 // pred_fallthru
        _
      %p464 = scmp.lt.s32.totalorder %s19, 7
      %s465 = scalar_select %p464, %s19, 7
      %p466 = scmp.lt.s32.totalorder %s20, 0
      %s467 = scalar_select %p466, %s20, 0
      %s468 = sadd.s32 %s467, %s465
      %s469 = smul.addr %s468, 4
      %s470 = scalar_lea.vmem %s3, %s469
      // Predicated region
      $region45: #{_lambda_.10} parent=31 // pred_check
        %p471 = pneg %p145
      $region46: #{_lambda_.10} parent=31 // pred_check_branch
        %473 = sbr.rel (%p471) target = $region48
      $region47: #{_lambda_.10} parent=31 // pred_region
        _
      $region48: #{_lambda_.10} parent=31 // pred_fallthru
        _
    $region32: #{_lambda_.10} parent=5 // pred_fallthru
      _
    %p474 = scmp.le.s32.totalorder 2, %s9
    // Predicated region
    $region49: #{_lambda_.10} parent=5 // pred_check
      %p475 = pneg %p474
    $region50: #{_lambda_.10} parent=5 // pred_check_branch
      %477 = sbr.rel (%p475) target = $region52
    $region51: #{_lambda_.10} parent=5 // pred_region
      %s478 = ssub.s32 %s9, 2
      // Predicated region
      $region53: #{_lambda_.10} parent=51 // pred_check
        %p479 = pneg %p151
      $region54: #{_lambda_.10} parent=51 // pred_check_branch
        %481 = sbr.rel (%p479) target = $region56
      $region55: #{_lambda_.10} parent=51 // pred_region
        %p482 = scmp.lt.s32.totalorder %s22, 7
        %s483 = scalar_select %p482, %s22, 7
        %p484 = scmp.lt.s32.totalorder %s23, 0
        %s485 = scalar_select %p484, %s23, 0
        %s486 = sadd.s32 %s485, %s483
        %s487 = smul.addr %s486, 4
        %s488 = scalar_lea.vmem %s3, %s487
      $region56: #{_lambda_.10} parent=51 // pred_fallthru
        _
    $region52: #{_lambda_.10} parent=5 // pred_fallthru
      _
  $region6: #{_lambda_.10} parent=0 // loop_footer
    %s13 = sadd.s32 1, %s9
  $region7: #{_lambda_.10} parent=0 // loop_footer_branch
    %8 = sbr.rel target = $region3
  $region8: #{_lambda_.10} parent=0 // loop_exit
    _

// kernel: _lambda_.11
$region0: #{_lambda_.11}
  #allocation0 [shape = 'u32[]', space=smem, size = 0x4, offset = 0x4, fixed_abs, tag = 'smem constant byte address 0x4 - core index']
  #allocation1 [shape = 'u32[144,128]{1,0:T(1,128)}', space=vmem, size = 0x12000, scoped, tag = 'internal scratch']
  %s0 = inlined_call_operand.vmem [shape: bf16[16,64], index: 0, kind: input, shape index: {}]
  %s1 = inlined_call_operand.vmem [shape: bf16[64,128], index: 1, kind: input, shape index: {}]
  %s2 = inlined_call_operand.vmem [shape: f32[1,128], index: 2, kind: input, shape index: {}]
  %s3 = inlined_call_operand.vmem [shape: bf16[16,128], index: 3, kind: input, shape index: {}]
  %s4 = inlined_call_operand.vmem [shape: bf16[16,128], index: 4, kind: output, shape index: {}]
  %s5 = sld [smem:[#allocation0]]
  $region26: #{_lambda_.11} parent=0
    _
  %s7 = ssub.s32 1, %s5
  %s8 = scalar_select 0, %s7, %s5
  // Predicated region
  $region2: #{_lambda_.11} parent=0 // pred_check
    _
  $region3: #{_lambda_.11} parent=0 // pred_check_branch
    %10 = sbr.rel (0) target = $region5
  $region4: #{_lambda_.11} parent=0 // pred_region
    _
  $region5: #{_lambda_.11} parent=0 // pred_fallthru
    _
  // Predicated region
  $region6: #{_lambda_.11} parent=0 // pred_check
    _
  $region7: #{_lambda_.11} parent=0 // pred_check_branch
    %12 = sbr.rel (0) target = $region9
  $region8: #{_lambda_.11} parent=0 // pred_region
    _
  $region9: #{_lambda_.11} parent=0 // pred_fallthru
    _
  // Predicated region
  $region10: #{_lambda_.11} parent=0 // pred_check
    _
  $region11: #{_lambda_.11} parent=0 // pred_check_branch
    %14 = sbr.rel (0) target = $region13
  $region12: #{_lambda_.11} parent=0 // pred_region
    _
  $region13: #{_lambda_.11} parent=0 // pred_fallthru
    _
  // Predicated region
  $region14: #{_lambda_.11} parent=0 // pred_check
    _
  $region15: #{_lambda_.11} parent=0 // pred_check_branch
    %16 = sbr.rel (0) target = $region17
  $region16: #{_lambda_.11} parent=0 // pred_region
    _
  $region17: #{_lambda_.11} parent=0 // pred_fallthru
    _
  %v18 = vld [vmem:[%s0] sm:$0xf]
  %v19 = vld [vmem:[%s0 + $0x4] sm:$0xf]
  %v20 = vld [vmem:[%s1] sm:$0xf]
  %v21 = vld [vmem:[%s1 + $0x4] sm:$0xf]
  %v22 = vld [vmem:[%s1 + $0x8] sm:$0xf]
  %v23 = vld [vmem:[%s1 + $0xc] sm:$0xf]
  %v24 = vld [vmem:[%s1 + $0x10] sm:$0xf]
  %v25 = vld [vmem:[%s1 + $0x14] sm:$0xf]
  %v26 = vld [vmem:[%s1 + $0x18] sm:$0xf]
  %v27 = vld [vmem:[%s1 + $0x1c] sm:$0xf]
  %v28 = vld [vmem:[%s2] sm:$0x1]
  %v30 = vlaneseq
  %v31 = vshrl.u32 %v30, 7
  %v32 = vsub.s32 0, %v31
  %v33 = vrot.slane %v28, %v32
  %v37 = vunpack.c.l.b16 %v18
  %v38 = vunpack.c.l.b16 %v19
  %v39 = vpack.c.b16 %v38, %v37
  %v48 = vunpack.c.l.b16 %v20
  %v49 = vunpack.c.l.b16 %v21
  %v50 = vunpack.c.l.b16 %v22
  %v51 = vunpack.c.l.b16 %v23
  %v52 = vunpack.c.l.b16 %v24
  %v53 = vunpack.c.l.b16 %v25
  %v54 = vunpack.c.l.b16 %v26
  %v55 = vunpack.c.l.b16 %v27
  %v56 = vpack.c.b16 %v49, %v48
  %v57 = vpack.c.b16 %v51, %v50
  %v58 = vpack.c.b16 %v53, %v52
  %v59 = vpack.c.b16 %v55, %v54
  %vm64 = vcmask 523264
  %v66 = vsel %vm64, %v39, 0
  %68 = vmatprep.subr.bf16.mxu0 0
  %69 = vmatpush1.bf16.msra.mxu0 0
  %70 = vmatprep.subr.bf16.mxu0 0
  %71 = vmatpush1.bf16.msra.mxu0 0
  %72 = vmatprep.subr.bf16.mxu0 0
  %73 = vmatpush1.bf16.msra.mxu0 0
  %74 = vmatprep.subr.bf16.mxu0 0
  %75 = vmatpush1.bf16.msra.mxu0 0
  %76 = vmatprep.subr.bf16.mxu0 0
  %77 = vmatpush1.bf16.msra.mxu0 %v59
  %78 = vmatprep.subr.bf16.mxu0 0
  %79 = vmatpush1.bf16.msra.mxu0 %v58
  %80 = vmatprep.subr.bf16.mxu0 0
  %81 = vmatpush1.bf16.msra.mxu0 %v57
  %82 = vmatprep.subr.bf16.mxu0 0
  %83 = vmatpush1.bf16.msra.mxu0 %v56
  %84 = vmatprep.subr.bf16.mxu0 0
  %85 = vmatpush2.bf16.msra.mxu0 0
  %86 = vmatprep.subr.bf16.mxu0 0
  %87 = vmatpush2.bf16.msra.mxu0 0
  %88 = vmatprep.subr.bf16.mxu0 0
  %89 = vmatpush2.bf16.msra.mxu0 0
  %90 = vmatprep.subr.bf16.mxu0 0
  %91 = vmatpush2.bf16.msra.mxu0 0
  %92 = vmatprep.subr.bf16.mxu0 0
  %93 = vmatpush2.bf16.msra.mxu0 0
  %94 = vmatprep.subr.bf16.mxu0 0
  %95 = vmatpush2.bf16.msra.mxu0 0
  %96 = vmatprep.subr.bf16.mxu0 0
  %97 = vmatpush2.bf16.msra.mxu0 0
  %98 = vmatprep.subr.bf16.mxu0 0
  %99 = vmatpush2.bf16.msra.mxu0 0
  %100 = vmatprep.mubr.bf16.mxu0 0
  %101 = vmatmul.mubr.bf16.gmra.mxu0 %v66
  %v102 = vpop.f32.mrf.mxu0
  %v103 = vadd.f32 %v33, %v102
  %v104 = vpop.f32.mrf.mxu0
  %v105 = vpop.f32.mrf.mxu0
  %v106 = vadd.f32 %v33, %v105
  %v107 = vpop.f32.mrf.mxu0
  %108 = vdwg.mxu0
  %v109 = vld [vmem:[%s3] sm:$0xf]
  %v110 = vld [vmem:[%s3 + $0x4] sm:$0xf]
  %v111 = vunpack.c.l.bf16 %v109
  %v112 = vunpack.c.l.bf16 %v110
  %v113 = vadd.f32 %v103, %v111
  %v114 = vadd.f32 %v106, %v112
  %v115 = vpack.c.bf16 %v114, %v113
  %v117 = vunpack.c.l.b16 %v115
  %v118 = vunpack.c.h.b16 %v115
  %v119 = vpack.c.b16 %v117, %v117
  %v120 = vpack.c.b16 %v118, %v118
  %123 = vst [vmem:[%s4] sm:$0xf] %v119
  %124 = vst [vmem:[%s4 + $0x4] sm:$0xf] %v120
  // Predicated region
  $region18: #{_lambda_.11} parent=0 // pred_check
    _
  $region19: #{_lambda_.11} parent=0 // pred_check_branch
    %126 = sbr.rel (0) target = $region21
  $region20: #{_lambda_.11} parent=0 // pred_region
    _
  $region21: #{_lambda_.11} parent=0 // pred_fallthru
    _
  // Predicated region
  $region22: #{_lambda_.11} parent=0 // pred_check
    _
  $region23: #{_lambda_.11} parent=0 // pred_check_branch
    %128 = sbr.rel (0) target = $region25
  $region24: #{_lambda_.11} parent=0 // pred_region
    _
  $region25: #{_lambda_.11} parent=0 // pred_fallthru
    _

// kernel: _lambda_.9
$region0: #{_lambda_.9}
  #allocation0 [shape = 'u32[]', space=smem, size = 0x4, offset = 0x4, fixed_abs, tag = 'smem constant byte address 0x4 - core index']
  #allocation1 [shape = 'u32[144,128]{1,0:T(1,128)}', space=vmem, size = 0x12000, scoped, tag = 'internal scratch']
  %s0 = inlined_call_operand.vmem [shape: bf16[16,64], index: 0, kind: input, shape index: {}]
  %s1 = inlined_call_operand.vmem [shape: f32[1,64], index: 1, kind: input, shape index: {}]
  %s2 = inlined_call_operand.vmem [shape: f32[1,64], index: 2, kind: input, shape index: {}]
  %s3 = inlined_call_operand.vmem [shape: bf16[64,256], index: 3, kind: input, shape index: {}]
  %s4 = inlined_call_operand.vmem [shape: f32[1,256], index: 4, kind: input, shape index: {}]
  %s5 = inlined_call_operand.vmem [shape: bf16[16,256], index: 5, kind: output, shape index: {}]
  %s6 = sld [smem:[#allocation0]]
  $region30: #{_lambda_.9} parent=0
    _
  %s8 = ssub.s32 1, %s6
  %s9 = scalar_select 0, %s8, %s6
  // Predicated region
  $region2: #{_lambda_.9} parent=0 // pred_check
    _
  $region3: #{_lambda_.9} parent=0 // pred_check_branch
    %11 = sbr.rel (0) target = $region5
  $region4: #{_lambda_.9} parent=0 // pred_region
    _
  $region5: #{_lambda_.9} parent=0 // pred_fallthru
    _
  // Predicated region
  $region6: #{_lambda_.9} parent=0 // pred_check
    _
  $region7: #{_lambda_.9} parent=0 // pred_check_branch
    %13 = sbr.rel (0) target = $region9
  $region8: #{_lambda_.9} parent=0 // pred_region
    _
  $region9: #{_lambda_.9} parent=0 // pred_fallthru
    _
  // Predicated region
  $region10: #{_lambda_.9} parent=0 // pred_check
    _
  $region11: #{_lambda_.9} parent=0 // pred_check_branch
    %15 = sbr.rel (0) target = $region13
  $region12: #{_lambda_.9} parent=0 // pred_region
    _
  $region13: #{_lambda_.9} parent=0 // pred_fallthru
    _
  // Predicated region
  $region14: #{_lambda_.9} parent=0 // pred_check
    _
  $region15: #{_lambda_.9} parent=0 // pred_check_branch
    %17 = sbr.rel (0) target = $region17
  $region16: #{_lambda_.9} parent=0 // pred_region
    _
  $region17: #{_lambda_.9} parent=0 // pred_fallthru
    _
  // Predicated region
  $region18: #{_lambda_.9} parent=0 // pred_check
    _
  $region19: #{_lambda_.9} parent=0 // pred_check_branch
    %19 = sbr.rel (0) target = $region21
  $region20: #{_lambda_.9} parent=0 // pred_region
    _
  $region21: #{_lambda_.9} parent=0 // pred_fallthru
    _
  %v21 = vld [vmem:[%s0] sm:$0xf]
  %v22 = vld [vmem:[%s0 + $0x4] sm:$0xf]
  %v23 = vld [vmem:[%s1] sm:$0x1]
  %v24 = vld [vmem:[%s2] sm:$0x1]
  %v25 = vunpack.c.l.bf16 %v21
  %v26 = vunpack.c.l.bf16 %v22
  %vm27 = vcmask 523264
  %v28 = vsel %vm27, %v25, 0.0
  %29 = vadd.xlane.f32.xlu0 %v28
  %v30 = vpop.xlane.xlu0 %29
  %v31 = vsel %vm27, %v26, 0.0
  %32 = vadd.xlane.f32.xlu0 %v31
  %v33 = vpop.xlane.xlu0 %32
  %v34 = vrcp.pop 64.0
  %v35 = vmul.f32 %v30, %v34
  %v36 = vmul.f32 %v33, %v34
  %v37 = vsub.f32 %v25, %v35
  %v38 = vsub.f32 %v26, %v36
  %v39 = vmul.f32 %v37, %v37
  %v40 = vmul.f32 %v38, %v38
  %v41 = vsel %vm27, %v39, 0.0
  %42 = vadd.xlane.f32.xlu0 %v41
  %v43 = vpop.xlane.xlu0 %42
  %v44 = vsel %vm27, %v40, 0.0
  %45 = vadd.xlane.f32.xlu0 %v44
  %v46 = vpop.xlane.xlu0 %45
  %v47 = vmul.f32 %v43, %v34
  %v48 = vmul.f32 %v46, %v34
  %v49 = vadd.f32 %v47, 1e-05
  %v50 = vadd.f32 %v48, 1e-05
  %v51 = vrsqrt.pop %v49
  %v52 = vrsqrt.pop %v50
  %v53 = vmul.f32 %v37, %v51
  %v54 = vmul.f32 %v38, %v52
  %v56 = vlaneseq
  %v57 = vshrl.u32 %v56, 7
  %v58 = vsub.s32 0, %v57
  %v59 = vrot.slane %v23, %v58
  %v61 = vmul.f32 %v53, %v59
  %v62 = vmul.f32 %v54, %v59
  %v64 = vlaneseq
  %v65 = vshrl.u32 %v64, 7
  %v66 = vsub.s32 0, %v65
  %v67 = vrot.slane %v24, %v66
  %v69 = vadd.f32 %v61, %v67
  %v70 = vadd.f32 %v62, %v67
  %v71 = vpack.c.bf16 %v70, %v69
  %v72 = vld [vmem:[%s3] sm:$0xff]
  %v73 = vld [vmem:[%s3 + $0x8] sm:$0xff]
  %v74 = vld [vmem:[%s3 + $0x10] sm:$0xff]
  %v75 = vld [vmem:[%s3 + $0x18] sm:$0xff]
  %v76 = vld [vmem:[%s3 + $0x20] sm:$0xff]
  %v77 = vld [vmem:[%s3 + $0x28] sm:$0xff]
  %v78 = vld [vmem:[%s3 + $0x30] sm:$0xff]
  %v79 = vld [vmem:[%s3 + $0x38] sm:$0xff]
  %v80 = vld [vmem:[%s4] sm:$0x3]
  %v82 = vlaneseq
  %v83 = vshrl.u32 %v82, 7
  %v84 = vsub.s32 0, %v83
  %v85 = vrot.slane %v80, %v84
  %v86 = vlaneseq
  %v87 = vshrl.u32 %v86, 7
  %v88 = vsub.s32 1, %v87
  %v89 = vrot.slane %v80, %v88
  %v100 = vunpack.c.l.b16 %v72
  %v101 = vunpack.c.h.b16 %v72
  %v102 = vunpack.c.l.b16 %v73
  %v103 = vunpack.c.h.b16 %v73
  %v104 = vunpack.c.l.b16 %v74
  %v105 = vunpack.c.h.b16 %v74
  %v106 = vunpack.c.l.b16 %v75
  %v107 = vunpack.c.h.b16 %v75
  %v108 = vunpack.c.l.b16 %v76
  %v109 = vunpack.c.h.b16 %v76
  %v110 = vunpack.c.l.b16 %v77
  %v111 = vunpack.c.h.b16 %v77
  %v112 = vunpack.c.l.b16 %v78
  %v113 = vunpack.c.h.b16 %v78
  %v114 = vunpack.c.l.b16 %v79
  %v115 = vunpack.c.h.b16 %v79
  %v116 = vpack.c.b16 %v102, %v100
  %v117 = vpack.c.b16 %v103, %v101
  %v118 = vpack.c.b16 %v106, %v104
  %v119 = vpack.c.b16 %v107, %v105
  %v120 = vpack.c.b16 %v110, %v108
  %v121 = vpack.c.b16 %v111, %v109
  %v122 = vpack.c.b16 %v114, %v112
  %v123 = vpack.c.b16 %v115, %v113
  %v133 = vsel %vm27, %v71, 0
  %135 = vmatprep.subr.bf16.mxu0 0
  %136 = vmatpush1.bf16.msra.mxu0 0
  %137 = vmatprep.subr.bf16.mxu0 0
  %138 = vmatpush1.bf16.msra.mxu0 0
  %139 = vmatprep.subr.bf16.mxu0 0
  %140 = vmatpush1.bf16.msra.mxu0 0
  %141 = vmatprep.subr.bf16.mxu0 0
  %142 = vmatpush1.bf16.msra.mxu0 0
  %143 = vmatprep.subr.bf16.mxu0 %v123
  %144 = vmatpush1.bf16.msra.mxu0 %v122
  %145 = vmatprep.subr.bf16.mxu0 %v121
  %146 = vmatpush1.bf16.msra.mxu0 %v120
  %147 = vmatprep.subr.bf16.mxu0 %v119
  %148 = vmatpush1.bf16.msra.mxu0 %v118
  %149 = vmatprep.subr.bf16.mxu0 %v117
  %150 = vmatpush1.bf16.msra.mxu0 %v116
  %151 = vmatprep.subr.bf16.mxu0 0
  %152 = vmatpush2.bf16.msra.mxu0 0
  %153 = vmatprep.subr.bf16.mxu0 0
  %154 = vmatpush2.bf16.msra.mxu0 0
  %155 = vmatprep.subr.bf16.mxu0 0
  %156 = vmatpush2.bf16.msra.mxu0 0
  %157 = vmatprep.subr.bf16.mxu0 0
  %158 = vmatpush2.bf16.msra.mxu0 0
  %159 = vmatprep.subr.bf16.mxu0 0
  %160 = vmatpush2.bf16.msra.mxu0 0
  %161 = vmatprep.subr.bf16.mxu0 0
  %162 = vmatpush2.bf16.msra.mxu0 0
  %163 = vmatprep.subr.bf16.mxu0 0
  %164 = vmatpush2.bf16.msra.mxu0 0
  %165 = vmatprep.subr.bf16.mxu0 0
  %166 = vmatpush2.bf16.msra.mxu0 0
  %167 = vmatprep.mubr.bf16.mxu0 0
  %168 = vmatmul.mubr.bf16.gmra.mxu0 %v133
  %v169 = vpop.f32.mrf.mxu0
  %v170 = vadd.f32 %v85, %v169
  %v171 = vpop.f32.mrf.mxu0
  %v172 = vadd.f32 %v89, %v171
  %v173 = vpop.f32.mrf.mxu0
  %v174 = vadd.f32 %v85, %v173
  %v175 = vpop.f32.mrf.mxu0
  %v176 = vadd.f32 %v89, %v175
  %177 = vdwg.mxu0
  %v178 = vpack.c.bf16 %v174, %v170
  %v179 = vpack.c.bf16 %v176, %v172
  %v182 = vunpack.c.l.b16 %v178
  %v183 = vunpack.c.l.b16 %v179
  %v184 = vunpack.c.h.b16 %v178
  %v185 = vunpack.c.h.b16 %v179
  %v186 = vpack.c.b16 %v183, %v182
  %v187 = vpack.c.b16 %v185, %v184
  %190 = vst [vmem:[%s5] sm:$0xff] %v186
  %191 = vst [vmem:[%s5 + $0x8] sm:$0xff] %v187
  // Predicated region
  $region22: #{_lambda_.9} parent=0 // pred_check
    _
  $region23: #{_lambda_.9} parent=0 // pred_check_branch
    %193 = sbr.rel (0) target = $region25
  $region24: #{_lambda_.9} parent=0 // pred_region
    _
  $region25: #{_lambda_.9} parent=0 // pred_fallthru
    _
  // Predicated region
  $region26: #{_lambda_.9} parent=0 // pred_check
    _
  $region27: #{_lambda_.9} parent=0 // pred_check_branch
    %195 = sbr.rel (0) target = $region29
  $region28: #{_lambda_.9} parent=0 // pred_region
    _
  $region29: #{_lambda_.9} parent=0 // pred_fallthru
    _

// kernel: _lambda_.12
$region0: #{_lambda_.12}
  #allocation0 [shape = 'u32[]', space=smem, size = 0x4, offset = 0x4, fixed_abs, tag = 'smem constant byte address 0x4 - core index']
  #allocation1 [shape = 'u32[144,128]{1,0:T(1,128)}', space=vmem, size = 0x12000, scoped, tag = 'internal scratch']
  #allocation2 [shape = 'f32[16,64]{1,0:T(8,128)}', space=vmem, size = 0x2000, scoped, tag = 'scratch operand']
  %s0 = inlined_call_operand.vmem [shape: bf16[16,64], index: 0, kind: input, shape index: {}]
  %s1 = inlined_call_operand.vmem [shape: f32[1,64], index: 1, kind: input, shape index: {}]
  %s2 = inlined_call_operand.vmem [shape: f32[1,64], index: 2, kind: input, shape index: {}]
  %s3 = inlined_call_operand.vmem [shape: bf16[64,256], index: 3, kind: input, shape index: {}]
  %s4 = inlined_call_operand.vmem [shape: f32[1,256], index: 4, kind: input, shape index: {}]
  %s5 = inlined_call_operand.vmem [shape: bf16[256,64], index: 5, kind: input, shape index: {}]
  %s6 = inlined_call_operand.vmem [shape: f32[1,64], index: 6, kind: input, shape index: {}]
  %s7 = inlined_call_operand.vmem [shape: bf16[16,64], index: 7, kind: output, shape index: {}]
  %s8 = sld [smem:[#allocation0]]
  $region46: #{_lambda_.12} parent=0
    _
  %s10 = ssub.s32 1, %s8
  %s11 = scalar_select 0, %s10, %s8
  // Predicated region
  $region2: #{_lambda_.12} parent=0 // pred_check
    _
  $region3: #{_lambda_.12} parent=0 // pred_check_branch
    %13 = sbr.rel (0) target = $region5
  $region4: #{_lambda_.12} parent=0 // pred_region
    _
  $region5: #{_lambda_.12} parent=0 // pred_fallthru
    _
  // Predicated region
  $region6: #{_lambda_.12} parent=0 // pred_check
    _
  $region7: #{_lambda_.12} parent=0 // pred_check_branch
    %15 = sbr.rel (0) target = $region9
  $region8: #{_lambda_.12} parent=0 // pred_region
    _
  $region9: #{_lambda_.12} parent=0 // pred_fallthru
    _
  // Predicated region
  $region10: #{_lambda_.12} parent=0 // pred_check
    _
  $region11: #{_lambda_.12} parent=0 // pred_check_branch
    %17 = sbr.rel (0) target = $region13
  $region12: #{_lambda_.12} parent=0 // pred_region
    _
  $region13: #{_lambda_.12} parent=0 // pred_fallthru
    _
  // Predicated region
  $region14: #{_lambda_.12} parent=0 // pred_check
    _
  $region15: #{_lambda_.12} parent=0 // pred_check_branch
    %19 = sbr.rel (0) target = $region17
  $region16: #{_lambda_.12} parent=0 // pred_region
    _
  $region17: #{_lambda_.12} parent=0 // pred_fallthru
    _
  // Predicated region
  $region18: #{_lambda_.12} parent=0 // pred_check
    _
  $region19: #{_lambda_.12} parent=0 // pred_check_branch
    %21 = sbr.rel (0) target = $region21
  $region20: #{_lambda_.12} parent=0 // pred_region
    _
  $region21: #{_lambda_.12} parent=0 // pred_fallthru
    _
  // Predicated region
  $region22: #{_lambda_.12} parent=0 // pred_check
    _
  $region23: #{_lambda_.12} parent=0 // pred_check_branch
    %23 = sbr.rel (0) target = $region25
  $region24: #{_lambda_.12} parent=0 // pred_region
    _
  $region25: #{_lambda_.12} parent=0 // pred_fallthru
    _
  // Predicated region
  $region26: #{_lambda_.12} parent=0 // pred_check
    _
  $region27: #{_lambda_.12} parent=0 // pred_check_branch
    %25 = sbr.rel (0) target = $region29
  $region28: #{_lambda_.12} parent=0 // pred_region
    _
  $region29: #{_lambda_.12} parent=0 // pred_fallthru
    _
  %p27 = scmp.eq.s32.totalorder 0, 0
  // Predicated region
  $region30: #{_lambda_.12} parent=0 // pred_check
    %p28 = pneg %p27
  $region31: #{_lambda_.12} parent=0 // pred_check_branch
    %30 = sbr.rel (%p28) target = $region33
  $region32: #{_lambda_.12} parent=0 // pred_region
    %vm31 = vcmask 523264
    %32 = vst.msk [vmem:[#allocation2] sm:$0xff] %vm31, 0.0
    %33 = vst.msk [vmem:[#allocation2 + $0x8] sm:$0xff] %vm31, 0.0
  $region33: #{_lambda_.12} parent=0 // pred_fallthru
    _
  %v34 = vld [vmem:[%s0] sm:$0xf]
  %v35 = vld [vmem:[%s0 + $0x4] sm:$0xf]
  %v36 = vld [vmem:[%s1] sm:$0x1]
  %v37 = vld [vmem:[%s2] sm:$0x1]
  %v38 = vunpack.c.l.bf16 %v34
  %v39 = vunpack.c.l.bf16 %v35
  %vm40 = vcmask 523264
  %v41 = vsel %vm40, %v38, 0.0
  %42 = vadd.xlane.f32.xlu0 %v41
  %v43 = vpop.xlane.xlu0 %42
  %v44 = vsel %vm40, %v39, 0.0
  %45 = vadd.xlane.f32.xlu0 %v44
  %v46 = vpop.xlane.xlu0 %45
  %v47 = vrcp.pop 64.0
  %v48 = vmul.f32 %v43, %v47
  %v49 = vmul.f32 %v46, %v47
  %v50 = vsub.f32 %v38, %v48
  %v51 = vsub.f32 %v39, %v49
  %v52 = vmul.f32 %v50, %v50
  %v53 = vmul.f32 %v51, %v51
  %v54 = vsel %vm40, %v52, 0.0
  %55 = vadd.xlane.f32.xlu0 %v54
  %v56 = vpop.xlane.xlu0 %55
  %v57 = vsel %vm40, %v53, 0.0
  %58 = vadd.xlane.f32.xlu0 %v57
  %v59 = vpop.xlane.xlu0 %58
  %v60 = vmul.f32 %v56, %v47
  %v61 = vmul.f32 %v59, %v47
  %v62 = vadd.f32 %v60, 1e-05
  %v63 = vadd.f32 %v61, 1e-05
  %v64 = vrsqrt.pop %v62
  %v65 = vrsqrt.pop %v63
  %v66 = vmul.f32 %v50, %v64
  %v67 = vmul.f32 %v51, %v65
  %v69 = vlaneseq
  %v70 = vshrl.u32 %v69, 7
  %v71 = vsub.s32 0, %v70
  %v72 = vrot.slane %v36, %v71
  %v74 = vmul.f32 %v66, %v72
  %v75 = vmul.f32 %v67, %v72
  %v77 = vlaneseq
  %v78 = vshrl.u32 %v77, 7
  %v79 = vsub.s32 0, %v78
  %v80 = vrot.slane %v37, %v79
  %v82 = vadd.f32 %v74, %v80
  %v83 = vadd.f32 %v75, %v80
  %v84 = vpack.c.bf16 %v83, %v82
  %v85 = vld [vmem:[%s3] sm:$0xff]
  %v86 = vld [vmem:[%s3 + $0x8] sm:$0xff]
  %v87 = vld [vmem:[%s3 + $0x10] sm:$0xff]
  %v88 = vld [vmem:[%s3 + $0x18] sm:$0xff]
  %v89 = vld [vmem:[%s3 + $0x20] sm:$0xff]
  %v90 = vld [vmem:[%s3 + $0x28] sm:$0xff]
  %v91 = vld [vmem:[%s3 + $0x30] sm:$0xff]
  %v92 = vld [vmem:[%s3 + $0x38] sm:$0xff]
  %v93 = vld [vmem:[%s4] sm:$0x3]
  %v95 = vlaneseq
  %v96 = vshrl.u32 %v95, 7
  %v97 = vsub.s32 0, %v96
  %v98 = vrot.slane %v93, %v97
  %v99 = vlaneseq
  %v100 = vshrl.u32 %v99, 7
  %v101 = vsub.s32 1, %v100
  %v102 = vrot.slane %v93, %v101
  %v113 = vunpack.c.l.b16 %v85
  %v114 = vunpack.c.h.b16 %v85
  %v115 = vunpack.c.l.b16 %v86
  %v116 = vunpack.c.h.b16 %v86
  %v117 = vunpack.c.l.b16 %v87
  %v118 = vunpack.c.h.b16 %v87
  %v119 = vunpack.c.l.b16 %v88
  %v120 = vunpack.c.h.b16 %v88
  %v121 = vunpack.c.l.b16 %v89
  %v122 = vunpack.c.h.b16 %v89
  %v123 = vunpack.c.l.b16 %v90
  %v124 = vunpack.c.h.b16 %v90
  %v125 = vunpack.c.l.b16 %v91
  %v126 = vunpack.c.h.b16 %v91
  %v127 = vunpack.c.l.b16 %v92
  %v128 = vunpack.c.h.b16 %v92
  %v129 = vpack.c.b16 %v115, %v113
  %v130 = vpack.c.b16 %v116, %v114
  %v131 = vpack.c.b16 %v119, %v117
  %v132 = vpack.c.b16 %v120, %v118
  %v133 = vpack.c.b16 %v123, %v121
  %v134 = vpack.c.b16 %v124, %v122
  %v135 = vpack.c.b16 %v127, %v125
  %v136 = vpack.c.b16 %v128, %v126
  %v146 = vsel %vm40, %v84, 0
  %148 = vmatprep.subr.bf16.mxu0 0
  %149 = vmatpush1.bf16.msra.mxu0 0
  %150 = vmatprep.subr.bf16.mxu0 0
  %151 = vmatpush1.bf16.msra.mxu0 0
  %152 = vmatprep.subr.bf16.mxu0 0
  %153 = vmatpush1.bf16.msra.mxu0 0
  %154 = vmatprep.subr.bf16.mxu0 0
  %155 = vmatpush1.bf16.msra.mxu0 0
  %156 = vmatprep.subr.bf16.mxu0 %v136
  %157 = vmatpush1.bf16.msra.mxu0 %v135
  %158 = vmatprep.subr.bf16.mxu0 %v134
  %159 = vmatpush1.bf16.msra.mxu0 %v133
  %160 = vmatprep.subr.bf16.mxu0 %v132
  %161 = vmatpush1.bf16.msra.mxu0 %v131
  %162 = vmatprep.subr.bf16.mxu0 %v130
  %163 = vmatpush1.bf16.msra.mxu0 %v129
  %164 = vmatprep.subr.bf16.mxu0 0
  %165 = vmatpush2.bf16.msra.mxu0 0
  %166 = vmatprep.subr.bf16.mxu0 0
  %167 = vmatpush2.bf16.msra.mxu0 0
  %168 = vmatprep.subr.bf16.mxu0 0
  %169 = vmatpush2.bf16.msra.mxu0 0
  %170 = vmatprep.subr.bf16.mxu0 0
  %171 = vmatpush2.bf16.msra.mxu0 0
  %172 = vmatprep.subr.bf16.mxu0 0
  %173 = vmatpush2.bf16.msra.mxu0 0
  %174 = vmatprep.subr.bf16.mxu0 0
  %175 = vmatpush2.bf16.msra.mxu0 0
  %176 = vmatprep.subr.bf16.mxu0 0
  %177 = vmatpush2.bf16.msra.mxu0 0
  %178 = vmatprep.subr.bf16.mxu0 0
  %179 = vmatpush2.bf16.msra.mxu0 0
  %180 = vmatprep.mubr.bf16.mxu0 0
  %181 = vmatmul.mubr.bf16.gmra.mxu0 %v146
  %v182 = vpop.f32.mrf.mxu0
  %v183 = vadd.f32 %v98, %v182
  %v184 = vpop.f32.mrf.mxu0
  %v185 = vadd.f32 %v102, %v184
  %v186 = vpop.f32.mrf.mxu0
  %v187 = vadd.f32 %v98, %v186
  %v188 = vpop.f32.mrf.mxu0
  %v189 = vadd.f32 %v102, %v188
  %190 = vdwg.mxu0
  %v191 = vmul.f32 %v183, 0.5
  %v192 = vmul.f32 %v185, 0.5
  %v193 = vmul.f32 %v187, 0.5
  %v194 = vmul.f32 %v189, 0.5
  %v195 = vmul.f32 %v183, 0.044715
  %v196 = vmul.f32 %v185, 0.044715
  %v197 = vmul.f32 %v187, 0.044715
  %v198 = vmul.f32 %v189, 0.044715
  %v199 = vmul.f32 %v195, %v183
  %v200 = vmul.f32 %v196, %v185
  %v201 = vmul.f32 %v197, %v187
  %v202 = vmul.f32 %v198, %v189
  %v203 = vmul.f32 %v199, %v183
  %v204 = vmul.f32 %v200, %v185
  %v205 = vmul.f32 %v201, %v187
  %v206 = vmul.f32 %v202, %v189
  %v207 = vadd.f32 %v183, %v203
  %v208 = vadd.f32 %v185, %v204
  %v209 = vadd.f32 %v187, %v205
  %v210 = vadd.f32 %v189, %v206
  %v211 = vmul.f32 %v207, 0.7978846
  %v212 = vmul.f32 %v208, 0.7978846
  %v213 = vmul.f32 %v209, 0.7978846
  %v214 = vmul.f32 %v210, 0.7978846
  %v215 = vtanh.pop %v211
  %v216 = vtanh.pop %v212
  %v217 = vtanh.pop %v213
  %v218 = vtanh.pop %v214
  %v219 = vadd.f32 %v215, 1.0
  %v220 = vadd.f32 %v216, 1.0
  %v221 = vadd.f32 %v217, 1.0
  %v222 = vadd.f32 %v218, 1.0
  %v223 = vmul.f32 %v191, %v219
  %v224 = vmul.f32 %v192, %v220
  %v225 = vmul.f32 %v193, %v221
  %v226 = vmul.f32 %v194, %v222
  %v227 = vld [vmem:[#allocation2] sm:$0xff]
  %v228 = vld [vmem:[#allocation2 + $0x8] sm:$0xff]
  %v229 = vpack.c.bf16 %v225, %v223
  %v230 = vpack.c.bf16 %v226, %v224
  %v231 = vld [vmem:[%s5] sm:$0xf]
  %v232 = vld [vmem:[%s5 + $0x4] sm:$0xf]
  %v233 = vld [vmem:[%s5 + $0x8] sm:$0xf]
  %v234 = vld [vmem:[%s5 + $0xc] sm:$0xf]
  %v235 = vld [vmem:[%s5 + $0x10] sm:$0xf]
  %v236 = vld [vmem:[%s5 + $0x14] sm:$0xf]
  %v237 = vld [vmem:[%s5 + $0x18] sm:$0xf]
  %v238 = vld [vmem:[%s5 + $0x1c] sm:$0xf]
  %v239 = vld [vmem:[%s5 + $0x20] sm:$0xf]
  %v240 = vld [vmem:[%s5 + $0x24] sm:$0xf]
  %v241 = vld [vmem:[%s5 + $0x28] sm:$0xf]
  %v242 = vld [vmem:[%s5 + $0x2c] sm:$0xf]
  %v243 = vld [vmem:[%s5 + $0x30] sm:$0xf]
  %v244 = vld [vmem:[%s5 + $0x34] sm:$0xf]
  %v245 = vld [vmem:[%s5 + $0x38] sm:$0xf]
  %v246 = vld [vmem:[%s5 + $0x3c] sm:$0xf]
  %v247 = vld [vmem:[%s5 + $0x40] sm:$0xf]
  %v248 = vld [vmem:[%s5 + $0x44] sm:$0xf]
  %v249 = vld [vmem:[%s5 + $0x48] sm:$0xf]
  %v250 = vld [vmem:[%s5 + $0x4c] sm:$0xf]
  %v251 = vld [vmem:[%s5 + $0x50] sm:$0xf]
  %v252 = vld [vmem:[%s5 + $0x54] sm:$0xf]
  %v253 = vld [vmem:[%s5 + $0x58] sm:$0xf]
  %v254 = vld [vmem:[%s5 + $0x5c] sm:$0xf]
  %v255 = vld [vmem:[%s5 + $0x60] sm:$0xf]
  %v256 = vld [vmem:[%s5 + $0x64] sm:$0xf]
  %v257 = vld [vmem:[%s5 + $0x68] sm:$0xf]
  %v258 = vld [vmem:[%s5 + $0x6c] sm:$0xf]
  %v259 = vld [vmem:[%s5 + $0x70] sm:$0xf]
  %v260 = vld [vmem:[%s5 + $0x74] sm:$0xf]
  %v261 = vld [vmem:[%s5 + $0x78] sm:$0xf]
  %v262 = vld [vmem:[%s5 + $0x7c] sm:$0xf]
  %v295 = vunpack.c.l.b16 %v231
  %v296 = vunpack.c.l.b16 %v232
  %v297 = vunpack.c.l.b16 %v233
  %v298 = vunpack.c.l.b16 %v234
  %v299 = vunpack.c.l.b16 %v235
  %v300 = vunpack.c.l.b16 %v236
  %v301 = vunpack.c.l.b16 %v237
  %v302 = vunpack.c.l.b16 %v238
  %v303 = vunpack.c.l.b16 %v239
  %v304 = vunpack.c.l.b16 %v240
  %v305 = vunpack.c.l.b16 %v241
  %v306 = vunpack.c.l.b16 %v242
  %v307 = vunpack.c.l.b16 %v243
  %v308 = vunpack.c.l.b16 %v244
  %v309 = vunpack.c.l.b16 %v245
  %v310 = vunpack.c.l.b16 %v246
  %v311 = vunpack.c.l.b16 %v247
  %v312 = vunpack.c.l.b16 %v248
  %v313 = vunpack.c.l.b16 %v249
  %v314 = vunpack.c.l.b16 %v250
  %v315 = vunpack.c.l.b16 %v251
  %v316 = vunpack.c.l.b16 %v252
  %v317 = vunpack.c.l.b16 %v253
  %v318 = vunpack.c.l.b16 %v254
  %v319 = vunpack.c.l.b16 %v255
  %v320 = vunpack.c.l.b16 %v256
  %v321 = vunpack.c.l.b16 %v257
  %v322 = vunpack.c.l.b16 %v258
  %v323 = vunpack.c.l.b16 %v259
  %v324 = vunpack.c.l.b16 %v260
  %v325 = vunpack.c.l.b16 %v261
  %v326 = vunpack.c.l.b16 %v262
  %v327 = vpack.c.b16 %v296, %v295
  %v328 = vpack.c.b16 %v298, %v297
  %v329 = vpack.c.b16 %v300, %v299
  %v330 = vpack.c.b16 %v302, %v301
  %v331 = vpack.c.b16 %v304, %v303
  %v332 = vpack.c.b16 %v306, %v305
  %v333 = vpack.c.b16 %v308, %v307
  %v334 = vpack.c.b16 %v310, %v309
  %v335 = vpack.c.b16 %v312, %v311
  %v336 = vpack.c.b16 %v314, %v313
  %v337 = vpack.c.b16 %v316, %v315
  %v338 = vpack.c.b16 %v318, %v317
  %v339 = vpack.c.b16 %v320, %v319
  %v340 = vpack.c.b16 %v322, %v321
  %v341 = vpack.c.b16 %v324, %v323
  %v342 = vpack.c.b16 %v326, %v325
  %359 = vmatprep.subr.bf16.mxu0 0
  %360 = vmatpush1.bf16.msra.mxu0 %v334
  %361 = vmatprep.subr.bf16.mxu0 0
  %362 = vmatpush1.bf16.msra.mxu0 %v333
  %363 = vmatprep.subr.bf16.mxu0 0
  %364 = vmatpush1.bf16.msra.mxu0 %v332
  %365 = vmatprep.subr.bf16.mxu0 0
  %366 = vmatpush1.bf16.msra.mxu0 %v331
  %367 = vmatprep.subr.bf16.mxu0 0
  %368 = vmatpush1.bf16.msra.mxu0 %v330
  %369 = vmatprep.subr.bf16.mxu0 0
  %370 = vmatpush1.bf16.msra.mxu0 %v329
  %371 = vmatprep.subr.bf16.mxu0 0
  %372 = vmatpush1.bf16.msra.mxu0 %v328
  %373 = vmatprep.subr.bf16.mxu0 0
  %374 = vmatpush1.bf16.msra.mxu0 %v327
  %375 = vmatprep.subr.bf16.mxu0 0
  %376 = vmatpush2.bf16.msra.mxu0 %v342
  %377 = vmatprep.subr.bf16.mxu0 0
  %378 = vmatpush2.bf16.msra.mxu0 %v341
  %379 = vmatprep.subr.bf16.mxu0 0
  %380 = vmatpush2.bf16.msra.mxu0 %v340
  %381 = vmatprep.subr.bf16.mxu0 0
  %382 = vmatpush2.bf16.msra.mxu0 %v339
  %383 = vmatprep.subr.bf16.mxu0 0
  %384 = vmatpush2.bf16.msra.mxu0 %v338
  %385 = vmatprep.subr.bf16.mxu0 0
  %386 = vmatpush2.bf16.msra.mxu0 %v337
  %387 = vmatprep.subr.bf16.mxu0 0
  %388 = vmatpush2.bf16.msra.mxu0 %v336
  %389 = vmatprep.subr.bf16.mxu0 0
  %390 = vmatpush2.bf16.msra.mxu0 %v335
  %391 = vmatprep.mubr.bf16.mxu0 %v230
  %392 = vmatmul.mubr.bf16.gmra.mxu0 %v229
  %v393 = vpop.f32.mrf.mxu0
  %v394 = vadd.f32 0.0, %v393
  %v395 = vpop.f32.mrf.mxu0
  %v396 = vpop.f32.mrf.mxu0
  %v397 = vadd.f32 0.0, %v396
  %v398 = vpop.f32.mrf.mxu0
  %399 = vdwg.mxu0
  %v400 = vadd.f32 %v227, %v394
  %v401 = vadd.f32 %v228, %v397
  %402 = vst.msk [vmem:[#allocation2] sm:$0xff] %vm40, %v400
  %403 = vst.msk [vmem:[#allocation2 + $0x8] sm:$0xff] %vm40, %v401
  // Predicated region
  $region34: #{_lambda_.12} parent=0 // pred_check
    %p404 = pneg %p27
  $region35: #{_lambda_.12} parent=0 // pred_check_branch
    %406 = sbr.rel (%p404) target = $region37
  $region36: #{_lambda_.12} parent=0 // pred_region
    %v407 = vld [vmem:[#allocation2] sm:$0xff]
    %v408 = vld [vmem:[#allocation2 + $0x8] sm:$0xff]
    %v409 = vld [vmem:[%s6] sm:$0x1]
    %v411 = vlaneseq
    %v412 = vshrl.u32 %v411, 7
    %v413 = vsub.s32 0, %v412
    %v414 = vrot.slane %v409, %v413
    %v416 = vadd.f32 %v407, %v414
    %v417 = vadd.f32 %v408, %v414
    %v418 = vld [vmem:[%s0] sm:$0xf]
    %v419 = vld [vmem:[%s0 + $0x4] sm:$0xf]
    %v420 = vunpack.c.l.bf16 %v418
    %v421 = vunpack.c.l.bf16 %v419
    %v422 = vadd.f32 %v416, %v420
    %v423 = vadd.f32 %v417, %v421
    %v424 = vpack.c.bf16 %v423, %v422
    %v426 = vunpack.c.l.b16 %v424
    %v427 = vunpack.c.h.b16 %v424
    %v428 = vpack.c.b16 %v426, %v426
    %v429 = vpack.c.b16 %v427, %v427
    %vm432 = vcmask 519168
    %433 = vst.msk [vmem:[%s7] sm:$0xf] %vm432, %v428
    %434 = vst.msk [vmem:[%s7 + $0x4] sm:$0xf] %vm432, %v429
  $region37: #{_lambda_.12} parent=0 // pred_fallthru
    _
  // Predicated region
  $region38: #{_lambda_.12} parent=0 // pred_check
    _
  $region39: #{_lambda_.12} parent=0 // pred_check_branch
    %436 = sbr.rel (0) target = $region41
  $region40: #{_lambda_.12} parent=0 // pred_region
    _
  $region41: #{_lambda_.12} parent=0 // pred_fallthru
    _
  // Predicated region
  $region42: #{_lambda_.12} parent=0 // pred_check
    _
  $region43: #{_lambda_.12} parent=0 // pred_check_branch
    %438 = sbr.rel (0) target = $region45
  $region44: #{_lambda_.12} parent=0 // pred_region
    _
  $region45: #{_lambda_.12} parent=0 // pred_fallthru
    _

// kernel: _lambda_.17
$region0: #{_lambda_.17}
  #allocation0 [shape = 'u32[]', space=smem, size = 0x4, offset = 0x4, fixed_abs, tag = 'smem constant byte address 0x4 - core index']
  #allocation1 [shape = 'u32[144,128]{1,0:T(1,128)}', space=vmem, size = 0x12000, scoped, tag = 'internal scratch']
  %s0 = inlined_call_operand.vmem [shape: bf16[16,64], index: 0, kind: input, shape index: {}]
  %s1 = inlined_call_operand.vmem [shape: f32[1,64], index: 1, kind: input, shape index: {}]
  %s2 = inlined_call_operand.vmem [shape: f32[1,64], index: 2, kind: input, shape index: {}]
  %s3 = inlined_call_operand.vmem [shape: bf16[64,128], index: 3, kind: input, shape index: {}]
  %s4 = inlined_call_operand.vmem [shape: f32[16,128], index: 4, kind: output, shape index: {}]
  %s5 = sld [smem:[#allocation0]]
  $region26: #{_lambda_.17} parent=0
    _
  %s7 = ssub.s32 1, %s5
  %s8 = scalar_select 0, %s7, %s5
  // Predicated region
  $region2: #{_lambda_.17} parent=0 // pred_check
    _
  $region3: #{_lambda_.17} parent=0 // pred_check_branch
    %10 = sbr.rel (0) target = $region5
  $region4: #{_lambda_.17} parent=0 // pred_region
    _
  $region5: #{_lambda_.17} parent=0 // pred_fallthru
    _
  // Predicated region
  $region6: #{_lambda_.17} parent=0 // pred_check
    _
  $region7: #{_lambda_.17} parent=0 // pred_check_branch
    %12 = sbr.rel (0) target = $region9
  $region8: #{_lambda_.17} parent=0 // pred_region
    _
  $region9: #{_lambda_.17} parent=0 // pred_fallthru
    _
  // Predicated region
  $region10: #{_lambda_.17} parent=0 // pred_check
    _
  $region11: #{_lambda_.17} parent=0 // pred_check_branch
    %14 = sbr.rel (0) target = $region13
  $region12: #{_lambda_.17} parent=0 // pred_region
    _
  $region13: #{_lambda_.17} parent=0 // pred_fallthru
    _
  // Predicated region
  $region14: #{_lambda_.17} parent=0 // pred_check
    _
  $region15: #{_lambda_.17} parent=0 // pred_check_branch
    %16 = sbr.rel (0) target = $region17
  $region16: #{_lambda_.17} parent=0 // pred_region
    _
  $region17: #{_lambda_.17} parent=0 // pred_fallthru
    _
  %v18 = vld [vmem:[%s0] sm:$0xf]
  %v19 = vld [vmem:[%s0 + $0x4] sm:$0xf]
  %v20 = vld [vmem:[%s1] sm:$0x1]
  %v21 = vld [vmem:[%s2] sm:$0x1]
  %v22 = vunpack.c.l.bf16 %v18
  %v23 = vunpack.c.l.bf16 %v19
  %vm24 = vcmask 523264
  %v25 = vsel %vm24, %v22, 0.0
  %26 = vadd.xlane.f32.xlu0 %v25
  %v27 = vpop.xlane.xlu0 %26
  %v28 = vsel %vm24, %v23, 0.0
  %29 = vadd.xlane.f32.xlu0 %v28
  %v30 = vpop.xlane.xlu0 %29
  %v31 = vrcp.pop 64.0
  %v32 = vmul.f32 %v27, %v31
  %v33 = vmul.f32 %v30, %v31
  %v34 = vsub.f32 %v22, %v32
  %v35 = vsub.f32 %v23, %v33
  %v36 = vmul.f32 %v34, %v34
  %v37 = vmul.f32 %v35, %v35
  %v38 = vsel %vm24, %v36, 0.0
  %39 = vadd.xlane.f32.xlu0 %v38
  %v40 = vpop.xlane.xlu0 %39
  %v41 = vsel %vm24, %v37, 0.0
  %42 = vadd.xlane.f32.xlu0 %v41
  %v43 = vpop.xlane.xlu0 %42
  %v44 = vmul.f32 %v40, %v31
  %v45 = vmul.f32 %v43, %v31
  %v46 = vadd.f32 %v44, 1e-05
  %v47 = vadd.f32 %v45, 1e-05
  %v48 = vrsqrt.pop %v46
  %v49 = vrsqrt.pop %v47
  %v50 = vmul.f32 %v34, %v48
  %v51 = vmul.f32 %v35, %v49
  %v53 = vlaneseq
  %v54 = vshrl.u32 %v53, 7
  %v55 = vsub.s32 0, %v54
  %v56 = vrot.slane %v20, %v55
  %v58 = vmul.f32 %v50, %v56
  %v59 = vmul.f32 %v51, %v56
  %v61 = vlaneseq
  %v62 = vshrl.u32 %v61, 7
  %v63 = vsub.s32 0, %v62
  %v64 = vrot.slane %v21, %v63
  %v66 = vadd.f32 %v58, %v64
  %v67 = vadd.f32 %v59, %v64
  %v68 = vpack.c.bf16 %v67, %v66
  %v69 = vld [vmem:[%s3] sm:$0xf]
  %v70 = vld [vmem:[%s3 + $0x4] sm:$0xf]
  %v71 = vld [vmem:[%s3 + $0x8] sm:$0xf]
  %v72 = vld [vmem:[%s3 + $0xc] sm:$0xf]
  %v73 = vld [vmem:[%s3 + $0x10] sm:$0xf]
  %v74 = vld [vmem:[%s3 + $0x14] sm:$0xf]
  %v75 = vld [vmem:[%s3 + $0x18] sm:$0xf]
  %v76 = vld [vmem:[%s3 + $0x1c] sm:$0xf]
  %v85 = vunpack.c.l.b16 %v69
  %v86 = vunpack.c.l.b16 %v70
  %v87 = vunpack.c.l.b16 %v71
  %v88 = vunpack.c.l.b16 %v72
  %v89 = vunpack.c.l.b16 %v73
  %v90 = vunpack.c.l.b16 %v74
  %v91 = vunpack.c.l.b16 %v75
  %v92 = vunpack.c.l.b16 %v76
  %v93 = vpack.c.b16 %v86, %v85
  %v94 = vpack.c.b16 %v88, %v87
  %v95 = vpack.c.b16 %v90, %v89
  %v96 = vpack.c.b16 %v92, %v91
  %v102 = vsel %vm24, %v68, 0
  %104 = vmatprep.subr.bf16.mxu0 0
  %105 = vmatpush1.bf16.msra.mxu0 0
  %106 = vmatprep.subr.bf16.mxu0 0
  %107 = vmatpush1.bf16.msra.mxu0 0
  %108 = vmatprep.subr.bf16.mxu0 0
  %109 = vmatpush1.bf16.msra.mxu0 0
  %110 = vmatprep.subr.bf16.mxu0 0
  %111 = vmatpush1.bf16.msra.mxu0 0
  %112 = vmatprep.subr.bf16.mxu0 0
  %113 = vmatpush1.bf16.msra.mxu0 %v96
  %114 = vmatprep.subr.bf16.mxu0 0
  %115 = vmatpush1.bf16.msra.mxu0 %v95
  %116 = vmatprep.subr.bf16.mxu0 0
  %117 = vmatpush1.bf16.msra.mxu0 %v94
  %118 = vmatprep.subr.bf16.mxu0 0
  %119 = vmatpush1.bf16.msra.mxu0 %v93
  %120 = vmatprep.subr.bf16.mxu0 0
  %121 = vmatpush2.bf16.msra.mxu0 0
  %122 = vmatprep.subr.bf16.mxu0 0
  %123 = vmatpush2.bf16.msra.mxu0 0
  %124 = vmatprep.subr.bf16.mxu0 0
  %125 = vmatpush2.bf16.msra.mxu0 0
  %126 = vmatprep.subr.bf16.mxu0 0
  %127 = vmatpush2.bf16.msra.mxu0 0
  %128 = vmatprep.subr.bf16.mxu0 0
  %129 = vmatpush2.bf16.msra.mxu0 0
  %130 = vmatprep.subr.bf16.mxu0 0
  %131 = vmatpush2.bf16.msra.mxu0 0
  %132 = vmatprep.subr.bf16.mxu0 0
  %133 = vmatpush2.bf16.msra.mxu0 0
  %134 = vmatprep.subr.bf16.mxu0 0
  %135 = vmatpush2.bf16.msra.mxu0 0
  %136 = vmatprep.mubr.bf16.mxu0 0
  %137 = vmatmul.mubr.bf16.gmra.mxu0 %v102
  %v138 = vpop.f32.mrf.mxu0
  %v139 = vadd.f32 0.0, %v138
  %v140 = vpop.f32.mrf.mxu0
  %v141 = vpop.f32.mrf.mxu0
  %v142 = vadd.f32 0.0, %v141
  %v143 = vpop.f32.mrf.mxu0
  %144 = vdwg.mxu0
  %145 = vst [vmem:[%s4] sm:$0xff] %v139
  %146 = vst [vmem:[%s4 + $0x8] sm:$0xff] %v142
  // Predicated region
  $region18: #{_lambda_.17} parent=0 // pred_check
    _
  $region19: #{_lambda_.17} parent=0 // pred_check_branch
    %148 = sbr.rel (0) target = $region21
  $region20: #{_lambda_.17} parent=0 // pred_region
    _
  $region21: #{_lambda_.17} parent=0 // pred_fallthru
    _
  // Predicated region
  $region22: #{_lambda_.17} parent=0 // pred_check
    _
  $region23: #{_lambda_.17} parent=0 // pred_check_branch
    %150 = sbr.rel (0) target = $region25
  $region24: #{_lambda_.17} parent=0 // pred_region
    _
  $region25: #{_lambda_.17} parent=0 // pred_fallthru
    _

</llo_original>
